<compile_context>
chip_gen: v7x
topology: tpu7x:2x2x1
jax: 0.10.0
libtpu: 0.0.40
codegen_flags: <defaults>
</compile_context>

<pallas_src>
import jax
import jax.numpy as jnp
from jax import lax
from jax.experimental import pallas as pl
from jax.experimental.pallas import tpu as pltpu


def _cvae_kernel(x_ref, w_ih_ref, w_hh_ref, b_gi_ref, b_hn_ref,
                 w_head_ref, b_pq_ref, out_ref, gi_scr):
    T, B, Din = x_ref.shape
    Hc = b_hn_ref.shape[1]          # combined hidden = enc_hid + fut_hid
    G = 3 * Hc                      # gate-major lane count [r | z | n]
    Z = out_ref.shape[1] // 2

    # ---- Hoisted + fused input->hidden projection: one big MXU pass ----
    # (T, B, Din) -> (T*B, Din) collapse keeps the minor (lane) dim: layout no-op.
    gi = jnp.dot(x_ref[...].reshape(T * B, Din), w_ih_ref[...],
                 preferred_element_type=jnp.float32) + b_gi_ref[...]
    gi_scr[...] = gi.reshape(T, B, G)

    w_hh = w_hh_ref[...]
    # Hoist the (1, Hc) -> (B, Hc) broadcast out of the recurrence (no per-step re-emit).
    b_hn = jnp.broadcast_to(b_hn_ref[...], (B, Hc))

    def step(t, h):
        gi_t = gi_scr[t]                                         # (B, 3*Hc)
        gh = jnp.dot(h, w_hh, preferred_element_type=jnp.float32)  # single block-diag push
        # r|z gates: lanes [0 : 2*Hc) == [0 : 128) at toy sizes -> one full-vreg EUP push.
        rz = jax.nn.sigmoid(gi_t[:, :2 * Hc] + gh[:, :2 * Hc])
        r = rz[:, :Hc]
        z = rz[:, Hc:]
        # n gate: lanes start at 2*Hc (== 128) -> vreg-aligned slice.
        n = jnp.tanh(gi_t[:, 2 * Hc:] + r * (gh[:, 2 * Hc:] + b_hn))
        return (1.0 - z) * n + z * h

    unroll = True if T <= 8 else 4   # full unroll only for small fixed T
    h = lax.fori_loop(0, T, step, jnp.zeros((B, Hc), jnp.float32), unroll=unroll)

    # ---- Single fused output head on the combined carry ----
    logits = (jnp.dot(h, w_head_ref[...], preferred_element_type=jnp.float32)
              + b_pq_ref[...])                                    # (B, 2*Z), layout [p | q]
    mean_p = jnp.mean(logits[:, :Z], axis=-1, keepdims=True)
    mean_q = jnp.mean(logits[:, Z:], axis=-1, keepdims=True)
    lane = lax.broadcasted_iota(jnp.int32, (B, 2 * Z), 1)
    # One lane-dense full-ref store (no partial store at lane offset Z).
    out_ref[...] = logits - jnp.where(lane < Z, mean_p, mean_q)

    # TODO(synk): td.OneHotCategorical object construction / sampling and the p_y_xz GMM
    # decoder reference undefined attributes in the source module; no in-kernel equivalent.


def cvae_forward(o_b, s_r, params):
    """o_b: (B, T, x_dim), s_r: (B, T, 2)  ->  (p_logits (B, z), q_logits (B, z))."""
    B, T, Dx = o_b.shape
    Dy = s_r.shape[2]
    Hx = params["wx_hh"].shape[0]
    Hy = params["wy_hh"].shape[0]
    Hc = Hx + Hy
    Z = params["w_xz"].shape[1]

    # Sublane alignment guard: keeps the (T,B,D)->(T*B,D) reshape and the per-step
    # gi_scr[t] (B, 3*Hc) loads layout no-ops.
    assert B % 8 == 0, "batch must be a multiple of 8 for sublane-aligned staging"

    f32 = jnp.float32
    # One-shot time-major transpose + lane concat only feeds the hoisted projection;
    # the recurrent loop never re-reads the raw sequence.
    ob_tm = jnp.transpose(o_b, (1, 0, 2)).astype(f32)            # (T, B, Dx)
    sr_tm = jnp.transpose(s_r, (1, 0, 2)).astype(f32)            # (T, B, Dy)
    x_comb = jnp.concatenate([ob_tm, sr_tm], axis=-1)            # (T, B, Dx+Dy)

    def blocks(w, H):
        return w[:, :H], w[:, H:2 * H], w[:, 2 * H:]

    # --- Fused block-diagonal input projection, gate-major columns [r_x r_y|z_x z_y|n_x n_y]
    rx_i, zx_i, nx_i = blocks(params["wx_ih"], Hx)
    ry_i, zy_i, ny_i = blocks(params["wy_ih"], Hy)
    zxy = jnp.zeros((Dx, Hy), f32)
    zyx = jnp.zeros((Dy, Hx), f32)
    w_ih_comb = jnp.concatenate([
        jnp.concatenate([rx_i, zxy, zx_i, zxy, nx_i, zxy], axis=1),
        jnp.concatenate([zyx, ry_i, zyx, zy_i, zyx, ny_i], axis=1),
    ], axis=0)                                                   # (Dx+Dy, 3*Hc)

    # --- Fused block-diagonal hidden matrix (single per-step MXU push)
    rx_h, zx_h, nx_h = blocks(params["wx_hh"], Hx)
    ry_h, zy_h, ny_h = blocks(params["wy_hh"], Hy)
    zxh = jnp.zeros((Hx, Hy), f32)
    zyh = jnp.zeros((Hy, Hx), f32)
    w_hh_comb = jnp.concatenate([
        jnp.concatenate([rx_h, zxh, zx_h, zxh, nx_h, zxh], axis=1),
        jnp.concatenate([zyh, ry_h, zyh, zy_h, zyh, ny_h], axis=1),
    ], axis=0)                                                   # (Hc, 3*Hc)

    # --- Biases: fold b_hh's r/z lanes into the hoisted-projection bias; only the n-gate
    #     hidden bias stays in the loop (exact PyTorch GRU semantics).
    brx_i, bzx_i, bnx_i = blocks(params["bx_ih"], Hx)
    bry_i, bzy_i, bny_i = blocks(params["by_ih"], Hy)
    brx_h, bzx_h, bnx_h = blocks(params["bx_hh"], Hx)
    bry_h, bzy_h, bny_h = blocks(params["by_hh"], Hy)
    b_gi_comb = jnp.concatenate([brx_i + brx_h, bry_i + bry_h,
                                 bzx_i + bzx_h, bzy_i + bzy_h,
                                 bnx_i, bny_i], axis=1)          # (1, 3*Hc)
    b_hn_comb = jnp.concatenate([bnx_h, bny_h], axis=1)          # (1, Hc)

    # --- Single fused output head on the combined carry: logits = [hx|hy] @ W_head + b
    w_head = jnp.concatenate([
        jnp.concatenate([params["w_xz"], params["w_xyz"][:Hx]], axis=1),
        jnp.concatenate([jnp.zeros((Hy, Z), f32), params["w_xyz"][Hx:]], axis=1),
    ], axis=0)                                                   # (Hc, 2*Z)
    b_pq = jnp.concatenate([params["b_xz"], params["b_xyz"]], axis=1)   # (1, 2*Z)

    vmem = pl.BlockSpec(memory_space=pltpu.MemorySpace.VMEM)
    args = (x_comb, w_ih_comb, w_hh_comb, b_gi_comb, b_hn_comb, w_head, b_pq)

    logits = pl.pallas_call(
        _cvae_kernel,
        out_shape=jax.ShapeDtypeStruct((B, 2 * Z), jnp.float32),
        in_specs=[vmem] * len(args),
        out_specs=vmem,
        scratch_shapes=[pltpu.VMEM((T, B, 3 * Hc), jnp.float32)],
    )(*args)
    return logits[:, :Z], logits[:, Z:]


def init_params(key, x_dim, enc_hid, fut_hid, z_dim):
    """Deterministic synthetic parameters, stored already transposed for (B,in)@(in,out)."""
    ks = jax.random.split(key, 10)
    s = 0.1

    def mk(k, shape):
        return jax.random.normal(k, shape, jnp.float32) * s

    return {
        # x_encoder GRU (input x_dim -> hidden enc_hid); gate order r,z,n (PyTorch)
        "wx_ih": mk(ks[0], (x_dim, 3 * enc_hid)),
        "wx_hh": mk(ks[1], (enc_hid, 3 * enc_hid)),
        "bx_ih": mk(ks[2], (1, 3 * enc_hid)),
        "bx_hh": mk(ks[3], (1, 3 * enc_hid)),
        # y_encoder GRU (input 2 -> hidden fut_hid)
        "wy_ih": mk(ks[4], (2, 3 * fut_hid)),
        "wy_hh": mk(ks[5], (fut_hid, 3 * fut_hid)),
        "by_ih": mk(ks[6], (1, 3 * fut_hid)),
        "by_hh": mk(ks[7], (1, 3 * fut_hid)),
        # x_to_z_layer: Linear(enc_hid, z_dim)
        "w_xz": mk(ks[8], (enc_hid, z_dim)),
        "b_xz": jnp.zeros((1, z_dim), jnp.float32),
        # xy_to_z_layer: Linear(enc_hid + fut_hid, z_dim)
        "w_xyz": mk(ks[9], (enc_hid + fut_hid, z_dim)),
        "b_xyz": jnp.zeros((1, z_dim), jnp.float32),
    }


def _reference(o_b, s_r, p):
    """Pure-JAX reference of the same forward path (for a sanity check)."""
    def gru(seq, w_ih, w_hh, b_ih, b_hh):
        H = w_hh.shape[0]
        h = jnp.zeros((seq.shape[0], H), jnp.float32)
        for t in range(seq.shape[1]):
            gi = seq[:, t, :] @ w_ih + b_ih
            gh = h @ w_hh + b_hh
            r = jax.nn.sigmoid(gi[:, :H] + gh[:, :H])
            z = jax.nn.sigmoid(gi[:, H:2 * H] + gh[:, H:2 * H])
            n = jnp.tanh(gi[:, 2 * H:] + r * gh[:, 2 * H:])
            h = (1 - z) * n + z * h
        return h

    hx = gru(o_b, p["wx_ih"], p["wx_hh"], p["bx_ih"], p["bx_hh"])
    hy = gru(s_r, p["wy_ih"], p["wy_hh"], p["by_ih"], p["by_hh"])
    pl_ = hx @ p["w_xz"] + p["b_xz"]
    ql_ = jnp.concatenate([hx, hy], 1) @ p["w_xyz"] + p["b_xyz"]
    return (pl_ - pl_.mean(-1, keepdims=True),
            ql_ - ql_.mean(-1, keepdims=True))


if __name__ == "__main__":
    B, T = 8, 8
    x_dim, enc_hid, fut_hid, z_dim = 16, 32, 32, 16

    key = jax.random.PRNGKey(0)
    k_ob, k_sr, k_par = jax.random.split(key, 3)
    o_b = jax.random.normal(k_ob, (B, T, x_dim), jnp.float32)
    s_r = jax.random.normal(k_sr, (B, T, 2), jnp.float32)
    params = init_params(k_par, x_dim, enc_hid, fut_hid, z_dim)

    p_logits, q_logits = cvae_forward(o_b, s_r, params)
    jax.block_until_ready((p_logits, q_logits))

    p_ref, q_ref = _reference(o_b, s_r, params)
    assert jnp.allclose(p_logits, p_ref, atol=1e-4), "p_z_x logits mismatch"
    assert jnp.allclose(q_logits, q_ref, atol=1e-4), "q_z_xy logits mismatch"

    print("KERNEL_OK")
</pallas_src>

<mosaic_0001>
module attributes {stable_mosaic.version = 11 : i64} {
  func.func @_cvae_kernel(%arg0: memref<8x8x18xf32, #tpu.memory_space<vmem>>, %arg1: memref<18x192xf32, #tpu.memory_space<vmem>>, %arg2: memref<64x192xf32, #tpu.memory_space<vmem>>, %arg3: memref<1x192xf32, #tpu.memory_space<vmem>>, %arg4: memref<1x64xf32, #tpu.memory_space<vmem>>, %arg5: memref<64x32xf32, #tpu.memory_space<vmem>>, %arg6: memref<1x32xf32, #tpu.memory_space<vmem>>, %arg7: memref<8x32xf32, #tpu.memory_space<vmem>>, %arg8: memref<8x8x192xf32, #tpu.memory_space<vmem>>) attributes {dimension_semantics = [], scalar_prefetch = 0 : i64, scratch_operands = 1 : i64, tpu.core_type = #tpu.core_type<tc>} {
    %c0 = arith.constant 0 : index
    %c0_0 = arith.constant 0 : index
    %c0_1 = arith.constant 0 : index
    %0 = vector.load %arg0[%c0, %c0_0, %c0_1] : memref<8x8x18xf32, #tpu.memory_space<vmem>>, vector<8x8x18xf32>
    %1 = vector.shape_cast %0 : vector<8x8x18xf32> to vector<64x18xf32>
    %c0_2 = arith.constant 0 : index
    %c0_3 = arith.constant 0 : index
    %2 = vector.load %arg1[%c0_2, %c0_3] : memref<18x192xf32, #tpu.memory_space<vmem>>, vector<18x192xf32>
    %cst = arith.constant dense<0.000000e+00> : vector<64x192xf32>
    %3 = tpu.matmul %1, %2, %cst {dimension_numbers = #tpu.dot_dimension_numbers<[1], [0], [0], [1], [0, 0, 1, 1], [], []>} : vector<64x18xf32>, vector<18x192xf32>, vector<64x192xf32> -> vector<64x192xf32>
    %c0_4 = arith.constant 0 : index
    %c0_5 = arith.constant 0 : index
    %4 = vector.load %arg3[%c0_4, %c0_5] : memref<1x192xf32, #tpu.memory_space<vmem>>, vector<1x192xf32>
    %5 = vector.broadcast %4 : vector<1x192xf32> to vector<64x192xf32>
    %6 = arith.addf %3, %5 : vector<64x192xf32>
    %7 = vector.shape_cast %6 : vector<64x192xf32> to vector<8x8x192xf32>
    %c0_6 = arith.constant 0 : index
    %c0_7 = arith.constant 0 : index
    %c0_8 = arith.constant 0 : index
    %8 = vector.load %arg8[%c0_6, %c0_7, %c0_8] : memref<8x8x192xf32, #tpu.memory_space<vmem>>, vector<8x8x192xf32>
    tpu.vector_store %arg8[%c0_6, %c0_7, %c0_8], %7 {strides = array<i32>} : memref<8x8x192xf32, #tpu.memory_space<vmem>>, vector<8x8x192xf32>,
    %c0_9 = arith.constant 0 : index
    %c0_10 = arith.constant 0 : index
    %9 = vector.load %arg2[%c0_9, %c0_10] : memref<64x192xf32, #tpu.memory_space<vmem>>, vector<64x192xf32>
    %c0_11 = arith.constant 0 : index
    %c0_12 = arith.constant 0 : index
    %10 = vector.load %arg4[%c0_11, %c0_12] : memref<1x64xf32, #tpu.memory_space<vmem>>, vector<1x64xf32>
    %11 = vector.shape_cast %10 : vector<1x64xf32> to vector<1x64xf32>
    %12 = vector.broadcast %11 : vector<1x64xf32> to vector<8x64xf32>
    %cst_13 = arith.constant 0.000000e+00 : f32
    %13 = vector.broadcast %cst_13 : f32 to vector<8x64xf32>
    %c0_i32 = arith.constant 0 : i32
    %14 = arith.index_cast %c0_i32 : i32 to index
    %c0_14 = arith.constant 0 : index
    %c0_15 = arith.constant 0 : index
    %15 = vector.load %arg8[%14, %c0_14, %c0_15] : memref<8x8x192xf32, #tpu.memory_space<vmem>>, vector<1x8x192xf32>
    %16 = vector.shape_cast %15 : vector<1x8x192xf32> to vector<8x192xf32>
    %cst_16 = arith.constant dense<0.000000e+00> : vector<8x192xf32>
    %17 = tpu.matmul %13, %9, %cst_16 {dimension_numbers = #tpu.dot_dimension_numbers<[1], [0], [0], [1], [0, 0, 1, 1], [], []>} : vector<8x64xf32>, vector<64x192xf32>, vector<8x192xf32> -> vector<8x192xf32>
    %18 = vector.extract_strided_slice %16 {offsets = [0, 0], sizes = [8, 128], strides = [1, 1]} : vector<8x192xf32> to vector<8x128xf32>
    %19 = vector.extract_strided_slice %17 {offsets = [0, 0], sizes = [8, 128], strides = [1, 1]} : vector<8x192xf32> to vector<8x128xf32>
    %20 = arith.addf %18, %19 : vector<8x128xf32>
    %21 = arith.negf %20 : vector<8x128xf32>
    %22 = math.exp %21 : vector<8x128xf32>
    %cst_17 = arith.constant 1.000000e+00 : f32
    %23 = vector.broadcast %cst_17 : f32 to vector<8x128xf32>
    %24 = arith.addf %23, %22 : vector<8x128xf32>
    %25 = arith.divf %23, %24 : vector<8x128xf32>
    %26 = vector.extract_strided_slice %25 {offsets = [0, 0], sizes = [8, 64], strides = [1, 1]} : vector<8x128xf32> to vector<8x64xf32>
    %27 = vector.extract_strided_slice %25 {offsets = [0, 64], sizes = [8, 64], strides = [1, 1]} : vector<8x128xf32> to vector<8x64xf32>
    %28 = vector.extract_strided_slice %16 {offsets = [0, 128], sizes = [8, 64], strides = [1, 1]} : vector<8x192xf32> to vector<8x64xf32>
    %29 = vector.extract_strided_slice %17 {offsets = [0, 128], sizes = [8, 64], strides = [1, 1]} : vector<8x192xf32> to vector<8x64xf32>
    %30 = arith.addf %29, %12 : vector<8x64xf32>
    %31 = arith.mulf %26, %30 : vector<8x64xf32>
    %32 = arith.addf %28, %31 : vector<8x64xf32>
    %33 = math.tanh %32 : vector<8x64xf32>
    %cst_18 = arith.constant 1.000000e+00 : f32
    %34 = vector.broadcast %cst_18 : f32 to vector<8x64xf32>
    %35 = arith.subf %34, %27 : vector<8x64xf32>
    %36 = arith.mulf %35, %33 : vector<8x64xf32>
    %37 = arith.mulf %27, %13 : vector<8x64xf32>
    %38 = arith.addf %36, %37 : vector<8x64xf32>
    %c1_i32 = arith.constant 1 : i32
    %39 = arith.index_cast %c1_i32 : i32 to index
    %c0_19 = arith.constant 0 : index
    %c0_20 = arith.constant 0 : index
    %40 = vector.load %arg8[%39, %c0_19, %c0_20] : memref<8x8x192xf32, #tpu.memory_space<vmem>>, vector<1x8x192xf32>
    %41 = vector.shape_cast %40 : vector<1x8x192xf32> to vector<8x192xf32>
    %cst_21 = arith.constant dense<0.000000e+00> : vector<8x192xf32>
    %42 = tpu.matmul %38, %9, %cst_21 {dimension_numbers = #tpu.dot_dimension_numbers<[1], [0], [0], [1], [0, 0, 1, 1], [], []>} : vector<8x64xf32>, vector<64x192xf32>, vector<8x192xf32> -> vector<8x192xf32>
    %43 = vector.extract_strided_slice %41 {offsets = [0, 0], sizes = [8, 128], strides = [1, 1]} : vector<8x192xf32> to vector<8x128xf32>
    %44 = vector.extract_strided_slice %42 {offsets = [0, 0], sizes = [8, 128], strides = [1, 1]} : vector<8x192xf32> to vector<8x128xf32>
    %45 = arith.addf %43, %44 : vector<8x128xf32>
    %46 = arith.negf %45 : vector<8x128xf32>
    %47 = math.exp %46 : vector<8x128xf32>
    %cst_22 = arith.constant 1.000000e+00 : f32
    %48 = vector.broadcast %cst_22 : f32 to vector<8x128xf32>
    %49 = arith.addf %48, %47 : vector<8x128xf32>
    %50 = arith.divf %48, %49 : vector<8x128xf32>
    %51 = vector.extract_strided_slice %50 {offsets = [0, 0], sizes = [8, 64], strides = [1, 1]} : vector<8x128xf32> to vector<8x64xf32>
    %52 = vector.extract_strided_slice %50 {offsets = [0, 64], sizes = [8, 64], strides = [1, 1]} : vector<8x128xf32> to vector<8x64xf32>
    %53 = vector.extract_strided_slice %41 {offsets = [0, 128], sizes = [8, 64], strides = [1, 1]} : vector<8x192xf32> to vector<8x64xf32>
    %54 = vector.extract_strided_slice %42 {offsets = [0, 128], sizes = [8, 64], strides = [1, 1]} : vector<8x192xf32> to vector<8x64xf32>
    %55 = arith.addf %54, %12 : vector<8x64xf32>
    %56 = arith.mulf %51, %55 : vector<8x64xf32>
    %57 = arith.addf %53, %56 : vector<8x64xf32>
    %58 = math.tanh %57 : vector<8x64xf32>
    %cst_23 = arith.constant 1.000000e+00 : f32
    %59 = vector.broadcast %cst_23 : f32 to vector<8x64xf32>
    %60 = arith.subf %59, %52 : vector<8x64xf32>
    %61 = arith.mulf %60, %58 : vector<8x64xf32>
    %62 = arith.mulf %52, %38 : vector<8x64xf32>
    %63 = arith.addf %61, %62 : vector<8x64xf32>
    %c2_i32 = arith.constant 2 : i32
    %64 = arith.index_cast %c2_i32 : i32 to index
    %c0_24 = arith.constant 0 : index
    %c0_25 = arith.constant 0 : index
    %65 = vector.load %arg8[%64, %c0_24, %c0_25] : memref<8x8x192xf32, #tpu.memory_space<vmem>>, vector<1x8x192xf32>
    %66 = vector.shape_cast %65 : vector<1x8x192xf32> to vector<8x192xf32>
    %cst_26 = arith.constant dense<0.000000e+00> : vector<8x192xf32>
    %67 = tpu.matmul %63, %9, %cst_26 {dimension_numbers = #tpu.dot_dimension_numbers<[1], [0], [0], [1], [0, 0, 1, 1], [], []>} : vector<8x64xf32>, vector<64x192xf32>, vector<8x192xf32> -> vector<8x192xf32>
    %68 = vector.extract_strided_slice %66 {offsets = [0, 0], sizes = [8, 128], strides = [1, 1]} : vector<8x192xf32> to vector<8x128xf32>
    %69 = vector.extract_strided_slice %67 {offsets = [0, 0], sizes = [8, 128], strides = [1, 1]} : vector<8x192xf32> to vector<8x128xf32>
    %70 = arith.addf %68, %69 : vector<8x128xf32>
    %71 = arith.negf %70 : vector<8x128xf32>
    %72 = math.exp %71 : vector<8x128xf32>
    %cst_27 = arith.constant 1.000000e+00 : f32
    %73 = vector.broadcast %cst_27 : f32 to vector<8x128xf32>
    %74 = arith.addf %73, %72 : vector<8x128xf32>
    %75 = arith.divf %73, %74 : vector<8x128xf32>
    %76 = vector.extract_strided_slice %75 {offsets = [0, 0], sizes = [8, 64], strides = [1, 1]} : vector<8x128xf32> to vector<8x64xf32>
    %77 = vector.extract_strided_slice %75 {offsets = [0, 64], sizes = [8, 64], strides = [1, 1]} : vector<8x128xf32> to vector<8x64xf32>
    %78 = vector.extract_strided_slice %66 {offsets = [0, 128], sizes = [8, 64], strides = [1, 1]} : vector<8x192xf32> to vector<8x64xf32>
    %79 = vector.extract_strided_slice %67 {offsets = [0, 128], sizes = [8, 64], strides = [1, 1]} : vector<8x192xf32> to vector<8x64xf32>
    %80 = arith.addf %79, %12 : vector<8x64xf32>
    %81 = arith.mulf %76, %80 : vector<8x64xf32>
    %82 = arith.addf %78, %81 : vector<8x64xf32>
    %83 = math.tanh %82 : vector<8x64xf32>
    %cst_28 = arith.constant 1.000000e+00 : f32
    %84 = vector.broadcast %cst_28 : f32 to vector<8x64xf32>
    %85 = arith.subf %84, %77 : vector<8x64xf32>
    %86 = arith.mulf %85, %83 : vector<8x64xf32>
    %87 = arith.mulf %77, %63 : vector<8x64xf32>
    %88 = arith.addf %86, %87 : vector<8x64xf32>
    %c3_i32 = arith.constant 3 : i32
    %89 = arith.index_cast %c3_i32 : i32 to index
    %c0_29 = arith.constant 0 : index
    %c0_30 = arith.constant 0 : index
    %90 = vector.load %arg8[%89, %c0_29, %c0_30] : memref<8x8x192xf32, #tpu.memory_space<vmem>>, vector<1x8x192xf32>
    %91 = vector.shape_cast %90 : vector<1x8x192xf32> to vector<8x192xf32>
    %cst_31 = arith.constant dense<0.000000e+00> : vector<8x192xf32>
    %92 = tpu.matmul %88, %9, %cst_31 {dimension_numbers = #tpu.dot_dimension_numbers<[1], [0], [0], [1], [0, 0, 1, 1], [], []>} : vector<8x64xf32>, vector<64x192xf32>, vector<8x192xf32> -> vector<8x192xf32>
    %93 = vector.extract_strided_slice %91 {offsets = [0, 0], sizes = [8, 128], strides = [1, 1]} : vector<8x192xf32> to vector<8x128xf32>
    %94 = vector.extract_strided_slice %92 {offsets = [0, 0], sizes = [8, 128], strides = [1, 1]} : vector<8x192xf32> to vector<8x128xf32>
    %95 = arith.addf %93, %94 : vector<8x128xf32>
    %96 = arith.negf %95 : vector<8x128xf32>
    %97 = math.exp %96 : vector<8x128xf32>
    %cst_32 = arith.constant 1.000000e+00 : f32
    %98 = vector.broadcast %cst_32 : f32 to vector<8x128xf32>
    %99 = arith.addf %98, %97 : vector<8x128xf32>
    %100 = arith.divf %98, %99 : vector<8x128xf32>
    %101 = vector.extract_strided_slice %100 {offsets = [0, 0], sizes = [8, 64], strides = [1, 1]} : vector<8x128xf32> to vector<8x64xf32>
    %102 = vector.extract_strided_slice %100 {offsets = [0, 64], sizes = [8, 64], strides = [1, 1]} : vector<8x128xf32> to vector<8x64xf32>
    %103 = vector.extract_strided_slice %91 {offsets = [0, 128], sizes = [8, 64], strides = [1, 1]} : vector<8x192xf32> to vector<8x64xf32>
    %104 = vector.extract_strided_slice %92 {offsets = [0, 128], sizes = [8, 64], strides = [1, 1]} : vector<8x192xf32> to vector<8x64xf32>
    %105 = arith.addf %104, %12 : vector<8x64xf32>
    %106 = arith.mulf %101, %105 : vector<8x64xf32>
    %107 = arith.addf %103, %106 : vector<8x64xf32>
    %108 = math.tanh %107 : vector<8x64xf32>
    %cst_33 = arith.constant 1.000000e+00 : f32
    %109 = vector.broadcast %cst_33 : f32 to vector<8x64xf32>
    %110 = arith.subf %109, %102 : vector<8x64xf32>
    %111 = arith.mulf %110, %108 : vector<8x64xf32>
    %112 = arith.mulf %102, %88 : vector<8x64xf32>
    %113 = arith.addf %111, %112 : vector<8x64xf32>
    %c4_i32 = arith.constant 4 : i32
    %114 = arith.index_cast %c4_i32 : i32 to index
    %c0_34 = arith.constant 0 : index
    %c0_35 = arith.constant 0 : index
    %115 = vector.load %arg8[%114, %c0_34, %c0_35] : memref<8x8x192xf32, #tpu.memory_space<vmem>>, vector<1x8x192xf32>
    %116 = vector.shape_cast %115 : vector<1x8x192xf32> to vector<8x192xf32>
    %cst_36 = arith.constant dense<0.000000e+00> : vector<8x192xf32>
    %117 = tpu.matmul %113, %9, %cst_36 {dimension_numbers = #tpu.dot_dimension_numbers<[1], [0], [0], [1], [0, 0, 1, 1], [], []>} : vector<8x64xf32>, vector<64x192xf32>, vector<8x192xf32> -> vector<8x192xf32>
    %118 = vector.extract_strided_slice %116 {offsets = [0, 0], sizes = [8, 128], strides = [1, 1]} : vector<8x192xf32> to vector<8x128xf32>
    %119 = vector.extract_strided_slice %117 {offsets = [0, 0], sizes = [8, 128], strides = [1, 1]} : vector<8x192xf32> to vector<8x128xf32>
    %120 = arith.addf %118, %119 : vector<8x128xf32>
    %121 = arith.negf %120 : vector<8x128xf32>
    %122 = math.exp %121 : vector<8x128xf32>
    %cst_37 = arith.constant 1.000000e+00 : f32
    %123 = vector.broadcast %cst_37 : f32 to vector<8x128xf32>
    %124 = arith.addf %123, %122 : vector<8x128xf32>
    %125 = arith.divf %123, %124 : vector<8x128xf32>
    %126 = vector.extract_strided_slice %125 {offsets = [0, 0], sizes = [8, 64], strides = [1, 1]} : vector<8x128xf32> to vector<8x64xf32>
    %127 = vector.extract_strided_slice %125 {offsets = [0, 64], sizes = [8, 64], strides = [1, 1]} : vector<8x128xf32> to vector<8x64xf32>
    %128 = vector.extract_strided_slice %116 {offsets = [0, 128], sizes = [8, 64], strides = [1, 1]} : vector<8x192xf32> to vector<8x64xf32>
    %129 = vector.extract_strided_slice %117 {offsets = [0, 128], sizes = [8, 64], strides = [1, 1]} : vector<8x192xf32> to vector<8x64xf32>
    %130 = arith.addf %129, %12 : vector<8x64xf32>
    %131 = arith.mulf %126, %130 : vector<8x64xf32>
    %132 = arith.addf %128, %131 : vector<8x64xf32>
    %133 = math.tanh %132 : vector<8x64xf32>
    %cst_38 = arith.constant 1.000000e+00 : f32
    %134 = vector.broadcast %cst_38 : f32 to vector<8x64xf32>
    %135 = arith.subf %134, %127 : vector<8x64xf32>
    %136 = arith.mulf %135, %133 : vector<8x64xf32>
    %137 = arith.mulf %127, %113 : vector<8x64xf32>
    %138 = arith.addf %136, %137 : vector<8x64xf32>
    %c5_i32 = arith.constant 5 : i32
    %139 = arith.index_cast %c5_i32 : i32 to index
    %c0_39 = arith.constant 0 : index
    %c0_40 = arith.constant 0 : index
    %140 = vector.load %arg8[%139, %c0_39, %c0_40] : memref<8x8x192xf32, #tpu.memory_space<vmem>>, vector<1x8x192xf32>
    %141 = vector.shape_cast %140 : vector<1x8x192xf32> to vector<8x192xf32>
    %cst_41 = arith.constant dense<0.000000e+00> : vector<8x192xf32>
    %142 = tpu.matmul %138, %9, %cst_41 {dimension_numbers = #tpu.dot_dimension_numbers<[1], [0], [0], [1], [0, 0, 1, 1], [], []>} : vector<8x64xf32>, vector<64x192xf32>, vector<8x192xf32> -> vector<8x192xf32>
    %143 = vector.extract_strided_slice %141 {offsets = [0, 0], sizes = [8, 128], strides = [1, 1]} : vector<8x192xf32> to vector<8x128xf32>
    %144 = vector.extract_strided_slice %142 {offsets = [0, 0], sizes = [8, 128], strides = [1, 1]} : vector<8x192xf32> to vector<8x128xf32>
    %145 = arith.addf %143, %144 : vector<8x128xf32>
    %146 = arith.negf %145 : vector<8x128xf32>
    %147 = math.exp %146 : vector<8x128xf32>
    %cst_42 = arith.constant 1.000000e+00 : f32
    %148 = vector.broadcast %cst_42 : f32 to vector<8x128xf32>
    %149 = arith.addf %148, %147 : vector<8x128xf32>
    %150 = arith.divf %148, %149 : vector<8x128xf32>
    %151 = vector.extract_strided_slice %150 {offsets = [0, 0], sizes = [8, 64], strides = [1, 1]} : vector<8x128xf32> to vector<8x64xf32>
    %152 = vector.extract_strided_slice %150 {offsets = [0, 64], sizes = [8, 64], strides = [1, 1]} : vector<8x128xf32> to vector<8x64xf32>
    %153 = vector.extract_strided_slice %141 {offsets = [0, 128], sizes = [8, 64], strides = [1, 1]} : vector<8x192xf32> to vector<8x64xf32>
    %154 = vector.extract_strided_slice %142 {offsets = [0, 128], sizes = [8, 64], strides = [1, 1]} : vector<8x192xf32> to vector<8x64xf32>
    %155 = arith.addf %154, %12 : vector<8x64xf32>
    %156 = arith.mulf %151, %155 : vector<8x64xf32>
    %157 = arith.addf %153, %156 : vector<8x64xf32>
    %158 = math.tanh %157 : vector<8x64xf32>
    %cst_43 = arith.constant 1.000000e+00 : f32
    %159 = vector.broadcast %cst_43 : f32 to vector<8x64xf32>
    %160 = arith.subf %159, %152 : vector<8x64xf32>
    %161 = arith.mulf %160, %158 : vector<8x64xf32>
    %162 = arith.mulf %152, %138 : vector<8x64xf32>
    %163 = arith.addf %161, %162 : vector<8x64xf32>
    %c6_i32 = arith.constant 6 : i32
    %164 = arith.index_cast %c6_i32 : i32 to index
    %c0_44 = arith.constant 0 : index
    %c0_45 = arith.constant 0 : index
    %165 = vector.load %arg8[%164, %c0_44, %c0_45] : memref<8x8x192xf32, #tpu.memory_space<vmem>>, vector<1x8x192xf32>
    %166 = vector.shape_cast %165 : vector<1x8x192xf32> to vector<8x192xf32>
    %cst_46 = arith.constant dense<0.000000e+00> : vector<8x192xf32>
    %167 = tpu.matmul %163, %9, %cst_46 {dimension_numbers = #tpu.dot_dimension_numbers<[1], [0], [0], [1], [0, 0, 1, 1], [], []>} : vector<8x64xf32>, vector<64x192xf32>, vector<8x192xf32> -> vector<8x192xf32>
    %168 = vector.extract_strided_slice %166 {offsets = [0, 0], sizes = [8, 128], strides = [1, 1]} : vector<8x192xf32> to vector<8x128xf32>
    %169 = vector.extract_strided_slice %167 {offsets = [0, 0], sizes = [8, 128], strides = [1, 1]} : vector<8x192xf32> to vector<8x128xf32>
    %170 = arith.addf %168, %169 : vector<8x128xf32>
    %171 = arith.negf %170 : vector<8x128xf32>
    %172 = math.exp %171 : vector<8x128xf32>
    %cst_47 = arith.constant 1.000000e+00 : f32
    %173 = vector.broadcast %cst_47 : f32 to vector<8x128xf32>
    %174 = arith.addf %173, %172 : vector<8x128xf32>
    %175 = arith.divf %173, %174 : vector<8x128xf32>
    %176 = vector.extract_strided_slice %175 {offsets = [0, 0], sizes = [8, 64], strides = [1, 1]} : vector<8x128xf32> to vector<8x64xf32>
    %177 = vector.extract_strided_slice %175 {offsets = [0, 64], sizes = [8, 64], strides = [1, 1]} : vector<8x128xf32> to vector<8x64xf32>
    %178 = vector.extract_strided_slice %166 {offsets = [0, 128], sizes = [8, 64], strides = [1, 1]} : vector<8x192xf32> to vector<8x64xf32>
    %179 = vector.extract_strided_slice %167 {offsets = [0, 128], sizes = [8, 64], strides = [1, 1]} : vector<8x192xf32> to vector<8x64xf32>
    %180 = arith.addf %179, %12 : vector<8x64xf32>
    %181 = arith.mulf %176, %180 : vector<8x64xf32>
    %182 = arith.addf %178, %181 : vector<8x64xf32>
    %183 = math.tanh %182 : vector<8x64xf32>
    %cst_48 = arith.constant 1.000000e+00 : f32
    %184 = vector.broadcast %cst_48 : f32 to vector<8x64xf32>
    %185 = arith.subf %184, %177 : vector<8x64xf32>
    %186 = arith.mulf %185, %183 : vector<8x64xf32>
    %187 = arith.mulf %177, %163 : vector<8x64xf32>
    %188 = arith.addf %186, %187 : vector<8x64xf32>
    %c7_i32 = arith.constant 7 : i32
    %189 = arith.index_cast %c7_i32 : i32 to index
    %c0_49 = arith.constant 0 : index
    %c0_50 = arith.constant 0 : index
    %190 = vector.load %arg8[%189, %c0_49, %c0_50] : memref<8x8x192xf32, #tpu.memory_space<vmem>>, vector<1x8x192xf32>
    %191 = vector.shape_cast %190 : vector<1x8x192xf32> to vector<8x192xf32>
    %cst_51 = arith.constant dense<0.000000e+00> : vector<8x192xf32>
    %192 = tpu.matmul %188, %9, %cst_51 {dimension_numbers = #tpu.dot_dimension_numbers<[1], [0], [0], [1], [0, 0, 1, 1], [], []>} : vector<8x64xf32>, vector<64x192xf32>, vector<8x192xf32> -> vector<8x192xf32>
    %193 = vector.extract_strided_slice %191 {offsets = [0, 0], sizes = [8, 128], strides = [1, 1]} : vector<8x192xf32> to vector<8x128xf32>
    %194 = vector.extract_strided_slice %192 {offsets = [0, 0], sizes = [8, 128], strides = [1, 1]} : vector<8x192xf32> to vector<8x128xf32>
    %195 = arith.addf %193, %194 : vector<8x128xf32>
    %196 = arith.negf %195 : vector<8x128xf32>
    %197 = math.exp %196 : vector<8x128xf32>
    %cst_52 = arith.constant 1.000000e+00 : f32
    %198 = vector.broadcast %cst_52 : f32 to vector<8x128xf32>
    %199 = arith.addf %198, %197 : vector<8x128xf32>
    %200 = arith.divf %198, %199 : vector<8x128xf32>
    %201 = vector.extract_strided_slice %200 {offsets = [0, 0], sizes = [8, 64], strides = [1, 1]} : vector<8x128xf32> to vector<8x64xf32>
    %202 = vector.extract_strided_slice %200 {offsets = [0, 64], sizes = [8, 64], strides = [1, 1]} : vector<8x128xf32> to vector<8x64xf32>
    %203 = vector.extract_strided_slice %191 {offsets = [0, 128], sizes = [8, 64], strides = [1, 1]} : vector<8x192xf32> to vector<8x64xf32>
    %204 = vector.extract_strided_slice %192 {offsets = [0, 128], sizes = [8, 64], strides = [1, 1]} : vector<8x192xf32> to vector<8x64xf32>
    %205 = arith.addf %204, %12 : vector<8x64xf32>
    %206 = arith.mulf %201, %205 : vector<8x64xf32>
    %207 = arith.addf %203, %206 : vector<8x64xf32>
    %208 = math.tanh %207 : vector<8x64xf32>
    %cst_53 = arith.constant 1.000000e+00 : f32
    %209 = vector.broadcast %cst_53 : f32 to vector<8x64xf32>
    %210 = arith.subf %209, %202 : vector<8x64xf32>
    %211 = arith.mulf %210, %208 : vector<8x64xf32>
    %212 = arith.mulf %202, %188 : vector<8x64xf32>
    %213 = arith.addf %211, %212 : vector<8x64xf32>
    %c8_i32 = arith.constant 8 : i32
    %c0_54 = arith.constant 0 : index
    %c0_55 = arith.constant 0 : index
    %214 = vector.load %arg5[%c0_54, %c0_55] : memref<64x32xf32, #tpu.memory_space<vmem>>, vector<64x32xf32>
    %cst_56 = arith.constant dense<0.000000e+00> : vector<8x32xf32>
    %215 = tpu.matmul %213, %214, %cst_56 {dimension_numbers = #tpu.dot_dimension_numbers<[1], [0], [0], [1], [0, 0, 1, 1], [], []>} : vector<8x64xf32>, vector<64x32xf32>, vector<8x32xf32> -> vector<8x32xf32>
    %c0_57 = arith.constant 0 : index
    %c0_58 = arith.constant 0 : index
    %216 = vector.load %arg6[%c0_57, %c0_58] : memref<1x32xf32, #tpu.memory_space<vmem>>, vector<1x32xf32>
    %217 = vector.broadcast %216 : vector<1x32xf32> to vector<8x32xf32>
    %218 = arith.addf %215, %217 : vector<8x32xf32>
    %219 = vector.extract_strided_slice %218 {offsets = [0, 0], sizes = [8, 16], strides = [1, 1]} : vector<8x32xf32> to vector<8x16xf32>
    %cst_59 = arith.constant dense<0.000000e+00> : vector<8xf32>
    %220 = vector.multi_reduction <add>, %219, %cst_59 [1] : vector<8x16xf32> to vector<8xf32>
    %221 = vector.shape_cast %220 : vector<8xf32> to vector<8x1xf32>
    %cst_60 = arith.constant 1.600000e+01 : f32
    %222 = vector.broadcast %cst_60 : f32 to vector<8x1xf32>
    %223 = arith.divf %221, %222 : vector<8x1xf32>
    %224 = vector.extract_strided_slice %218 {offsets = [0, 16], sizes = [8, 16], strides = [1, 1]} : vector<8x32xf32> to vector<8x16xf32>
    %cst_61 = arith.constant dense<0.000000e+00> : vector<8xf32>
    %225 = vector.multi_reduction <add>, %224, %cst_61 [1] : vector<8x16xf32> to vector<8xf32>
    %226 = vector.shape_cast %225 : vector<8xf32> to vector<8x1xf32>
    %cst_62 = arith.constant 1.600000e+01 : f32
    %227 = vector.broadcast %cst_62 : f32 to vector<8x1xf32>
    %228 = arith.divf %226, %227 : vector<8x1xf32>
    %229 = tpu.iota {dimensions = array<i32: 1>} : vector<8x32xi32>
    %c16_i32 = arith.constant 16 : i32
    %230 = vector.broadcast %c16_i32 : i32 to vector<8x32xi32>
    %231 = arith.cmpi slt, %229, %230 : vector<8x32xi32>
    %232 = vector.shape_cast %223 : vector<8x1xf32> to vector<8x1xf32>
    %233 = vector.broadcast %232 : vector<8x1xf32> to vector<8x32xf32>
    %234 = vector.shape_cast %228 : vector<8x1xf32> to vector<8x1xf32>
    %235 = vector.broadcast %234 : vector<8x1xf32> to vector<8x32xf32>
    %236 = arith.select %231, %233, %235 : vector<8x32xi1>, vector<8x32xf32>
    %237 = arith.subf %218, %236 : vector<8x32xf32>
    %c0_63 = arith.constant 0 : index
    %c0_64 = arith.constant 0 : index
    %238 = vector.load %arg7[%c0_63, %c0_64] : memref<8x32xf32, #tpu.memory_space<vmem>>, vector<8x32xf32>
    tpu.vector_store %arg7[%c0_63, %c0_64], %237 {strides = array<i32>} : memref<8x32xf32, #tpu.memory_space<vmem>>, vector<8x32xf32>,
    return
  }
}

</mosaic_0001>

<llo_original>
// kernel: tpu_custom_call.1
$region0: #{tpu_custom_call.1}
  #allocation0 [shape = 'u32[]', space=smem, size = 0x4, offset = 0x4, fixed_abs, tag = 'smem constant byte address 0x4 - core index']
  #allocation1 [shape = 'u32[144,128]{1,0:T(1,128)}', space=vmem, size = 0x12000, scoped, tag = 'internal scratch']
  #allocation2 [shape = 'f32[8,8,192]{2,1,0:T(8,128)}', space=vmem, size = 0x10000, scoped, tag = 'scratch operand']
  %s0 = inlined_call_operand.vmem [shape: f32[8,8,18], index: 0, kind: input, shape index: {}]
  %s1 = inlined_call_operand.hbm [shape: f32[18,192], index: 1, kind: input, shape index: {}]
  %s2 = inlined_call_operand.hbm [shape: f32[64,192], index: 2, kind: input, shape index: {}]
  %s3 = inlined_call_operand.vmem [shape: f32[1,192], index: 3, kind: input, shape index: {}]
  %s4 = inlined_call_operand.vmem [shape: f32[1,64], index: 4, kind: input, shape index: {}]
  %s5 = inlined_call_operand.vmem [shape: f32[64,32], index: 5, kind: input, shape index: {}]
  %s6 = inlined_call_operand.vmem [shape: f32[1,32], index: 6, kind: input, shape index: {}]
  %s7 = inlined_call_operand.hbm [shape: f32[8,32], index: 7, kind: output, shape index: {}]
  %s8 = sld [smem:[#allocation0]]
  $region46: #{tpu_custom_call.1} parent=0
    _
  %s10 = ssub.s32 1, %s8
  %s11 = scalar_select 0, %s10, %s8
  $region1: #{tpu_custom_call.1} parent=0
    #allocation3 [shape = 'u8[24576]{0}', space=vmem, size = 0x6000, scoped, tag = 'input window, operand 1, single buffered']
    #allocation4 [shape = 's32[1]{0}', space=sflag, size = 0x4, scoped, tag = 'scoped memory for tpu_custom_call.1']
    #allocation5 [shape = 's32[1]{0}', space=sflag, size = 0x4, scoped, tag = 'scoped memory for tpu_custom_call.1']
    #allocation6 [shape = 'u8[65536]{0}', space=vmem, size = 0x10000, scoped, tag = 'input window, operand 2, single buffered']
    #allocation7 [shape = 's32[1]{0}', space=sflag, size = 0x4, scoped, tag = 'scoped memory for tpu_custom_call.1']
    #allocation8 [shape = 'u8[4096]{0}', space=vmem, size = 0x1000, scoped, tag = 'output window, operand 0, single buffered']
    %12 = vsyncpa [#allocation4], 0
    %13 = vsyncpa [#allocation7], 0
    %14 = vsyncpa [#allocation5], 0
    // Predicated region
    $region2: #{tpu_custom_call.1} parent=1 // pred_check
      _
    $region3: #{tpu_custom_call.1} parent=1 // pred_check_branch
      %16 = sbr.rel (0) target = $region5
    $region4: #{tpu_custom_call.1} parent=1 // pred_region
      _
    $region5: #{tpu_custom_call.1} parent=1 // pred_fallthru
      _
    // Predicated region
    $region6: #{tpu_custom_call.1} parent=1 // pred_check
      _
    $region7: #{tpu_custom_call.1} parent=1 // pred_check_branch
      %18 = sbr.rel (0) target = $region9
    $region8: #{tpu_custom_call.1} parent=1 // pred_region
      %s20 = ssub.s32 768, 768
      %21 = vsyncadd [#allocation4], %s20
      %s22 = sshll.u32 [#allocation3], 4
      %s23 = int_to_ptr.vmem [resolvable:$true] %s22
      %28 = dma.hbm_to_vmem [thread:$0]  %s1, 768, %s23, [#allocation4], 256, 256, 16
    $region9: #{tpu_custom_call.1} parent=1 // pred_fallthru
      _
    // Predicated region
    $region10: #{tpu_custom_call.1} parent=1 // pred_check
      _
    $region11: #{tpu_custom_call.1} parent=1 // pred_check_branch
      %30 = sbr.rel (0) target = $region13
    $region12: #{tpu_custom_call.1} parent=1 // pred_region
      %s32 = ssub.s32 2048, 2048
      %33 = vsyncadd [#allocation7], %s32
      %s34 = sshll.u32 [#allocation6], 4
      %s35 = int_to_ptr.vmem [resolvable:$true] %s34
      %40 = dma.hbm_to_vmem [thread:$0]  %s2, 2048, %s35, [#allocation7], 256, 256, 16
    $region13: #{tpu_custom_call.1} parent=1 // pred_fallthru
      _
    // Predicated region
    $region14: #{tpu_custom_call.1} parent=1 // pred_check
      _
    $region15: #{tpu_custom_call.1} parent=1 // pred_check_branch
      %42 = sbr.rel (0) target = $region17
    $region16: #{tpu_custom_call.1} parent=1 // pred_region
      _
    $region17: #{tpu_custom_call.1} parent=1 // pred_fallthru
      _
    // Predicated region
    $region18: #{tpu_custom_call.1} parent=1 // pred_check
      _
    $region19: #{tpu_custom_call.1} parent=1 // pred_check_branch
      %44 = sbr.rel (0) target = $region21
    $region20: #{tpu_custom_call.1} parent=1 // pred_region
      _
    $region21: #{tpu_custom_call.1} parent=1 // pred_fallthru
      _
    // Predicated region
    $region22: #{tpu_custom_call.1} parent=1 // pred_check
      _
    $region23: #{tpu_custom_call.1} parent=1 // pred_check_branch
      %46 = sbr.rel (0) target = $region25
    $region24: #{tpu_custom_call.1} parent=1 // pred_region
      _
    $region25: #{tpu_custom_call.1} parent=1 // pred_fallthru
      _
    // Predicated region
    $region26: #{tpu_custom_call.1} parent=1 // pred_check
      _
    $region27: #{tpu_custom_call.1} parent=1 // pred_check_branch
      %48 = sbr.rel (0) target = $region29
    $region28: #{tpu_custom_call.1} parent=1 // pred_region
      _
    $region29: #{tpu_custom_call.1} parent=1 // pred_fallthru
      _
    // Predicated region
    $region30: #{tpu_custom_call.1} parent=1 // pred_check
      _
    $region31: #{tpu_custom_call.1} parent=1 // pred_check_branch
      %50 = sbr.rel (0) target = $region33
    $region32: #{tpu_custom_call.1} parent=1 // pred_region
      %51 = dma.done [#allocation4], 768
    $region33: #{tpu_custom_call.1} parent=1 // pred_fallthru
      _
    // Predicated region
    $region34: #{tpu_custom_call.1} parent=1 // pred_check
      _
    $region35: #{tpu_custom_call.1} parent=1 // pred_check_branch
      %53 = sbr.rel (0) target = $region37
    $region36: #{tpu_custom_call.1} parent=1 // pred_region
      %54 = dma.done [#allocation7], 2048
    $region37: #{tpu_custom_call.1} parent=1 // pred_fallthru
      _
    %v55 = vld [vmem:[%s0] sm:$0xff]
    %v56 = vld [vmem:[%s0 + $0x8] sm:$0xff]
    %v57 = vld [vmem:[%s0 + $0x10] sm:$0xff]
    %v58 = vld [vmem:[%s0 + $0x18] sm:$0xff]
    %v59 = vld [vmem:[%s0 + $0x20] sm:$0xff]
    %v60 = vld [vmem:[%s0 + $0x28] sm:$0xff]
    %v61 = vld [vmem:[%s0 + $0x30] sm:$0xff]
    %v62 = vld [vmem:[%s0 + $0x38] sm:$0xff]
    %v63 = vld [vmem:[#allocation3] sm:$0xff]
    %v64 = vld [vmem:[#allocation3 + $0x8] sm:$0xff]
    %v65 = vld [vmem:[#allocation3 + $0x10] sm:$0xff]
    %v66 = vld [vmem:[#allocation3 + $0x18] sm:$0xff]
    %v67 = vld [vmem:[#allocation3 + $0x20] sm:$0x3]
    %v68 = vld [vmem:[#allocation3 + $0x28] sm:$0x3]
    %v69 = vld [vmem:[%s3] sm:$0x3]
    %v71 = vlaneseq
    %v72 = vshrl.u32 %v71, 7
    %v73 = vsub.s32 0, %v72
    %v74 = vrot.slane %v69, %v73
    %v75 = vlaneseq
    %v76 = vshrl.u32 %v75, 7
    %v77 = vsub.s32 1, %v76
    %v78 = vrot.slane %v69, %v77
    %vm81 = vcmask 146432
    %v83 = vsel %vm81, %v55, 0
    %v86 = vsel %vm81, %v56, 0
    %v89 = vsel %vm81, %v57, 0
    %v92 = vsel %vm81, %v58, 0
    %v95 = vsel %vm81, %v59, 0
    %v98 = vsel %vm81, %v60, 0
    %v101 = vsel %vm81, %v61, 0
    %v104 = vsel %vm81, %v62, 0
    %vm106 = vcmask 1041408
    %v108 = vsel %vm106, %v67, 0
    %v111 = vsel %vm106, %v68, 0
    %113 = vmatprep.subr.mxu0 %v64
    %114 = vmatpush1.msra.mxu0 %v63
    %115 = vmatprep.subr.mxu0 %v66
    %116 = vmatpush1.msra.mxu0 %v65
    %117 = vmatprep.subr.mxu0 %v111
    %118 = vmatpush1.msra.mxu0 %v108
    %119 = vmatprep.subr.mxu0 0.0
    %120 = vmatpush1.msra.mxu0 0.0
    %121 = vmatprep.subr.mxu0 0.0
    %122 = vmatpush1.msra.mxu0 0.0
    %123 = vmatprep.subr.mxu0 0.0
    %124 = vmatpush1.msra.mxu0 0.0
    %125 = vmatprep.subr.mxu0 0.0
    %126 = vmatpush1.msra.mxu0 0.0
    %127 = vmatprep.subr.mxu0 0.0
    %128 = vmatpush1.msra.mxu0 0.0
    %129 = vmatprep.subr.mxu0 0.0
    %130 = vmatpush1.msra.mxu0 0.0
    %131 = vmatprep.subr.mxu0 0.0
    %132 = vmatpush1.msra.mxu0 0.0
    %133 = vmatprep.subr.mxu0 0.0
    %134 = vmatpush1.msra.mxu0 0.0
    %135 = vmatprep.subr.mxu0 0.0
    %136 = vmatpush1.msra.mxu0 0.0
    %137 = vmatprep.subr.mxu0 0.0
    %138 = vmatpush1.msra.mxu0 0.0
    %139 = vmatprep.subr.mxu0 0.0
    %140 = vmatpush1.msra.mxu0 0.0
    %141 = vmatprep.subr.mxu0 0.0
    %142 = vmatpush1.msra.mxu0 0.0
    %143 = vmatprep.subr.mxu0 0.0
    %144 = vmatpush1.msra.mxu0 0.0
    %145 = vmatprep.subr.mxu0 0.0
    %146 = vmatpush1.msra.mxu0 0.0
    %147 = vmatprep.subr.mxu0 0.0
    %148 = vmatpush1.msra.mxu0 0.0
    %149 = vmatprep.subr.mxu0 0.0
    %150 = vmatpush1.msra.mxu0 0.0
    %151 = vmatprep.subr.mxu0 0.0
    %152 = vmatpush1.msra.mxu0 0.0
    %153 = vmatprep.subr.mxu0 0.0
    %154 = vmatpush1.msra.mxu0 0.0
    %155 = vmatprep.subr.mxu0 0.0
    %156 = vmatpush1.msra.mxu0 0.0
    %157 = vmatprep.subr.mxu0 0.0
    %158 = vmatpush1.msra.mxu0 0.0
    %159 = vmatprep.subr.mxu0 0.0
    %160 = vmatpush1.msra.mxu0 0.0
    %161 = vmatprep.subr.mxu0 0.0
    %162 = vmatpush1.msra.mxu0 0.0
    %163 = vmatprep.subr.mxu0 0.0
    %164 = vmatpush1.msra.mxu0 0.0
    %165 = vmatprep.subr.mxu0 0.0
    %166 = vmatpush1.msra.mxu0 0.0
    %167 = vmatprep.subr.mxu0 0.0
    %168 = vmatpush1.msra.mxu0 0.0
    %169 = vmatprep.subr.mxu0 0.0
    %170 = vmatpush1.msra.mxu0 0.0
    %171 = vmatprep.subr.mxu0 0.0
    %172 = vmatpush1.msra.mxu0 0.0
    %173 = vmatprep.subr.mxu0 0.0
    %174 = vmatpush1.msra.mxu0 0.0
    %175 = vmatprep.subr.mxu0 0.0
    %176 = vmatpush1.msra.mxu0 0.0
    %177 = vmatprep.mubr.f32.mxu0 0.0
    %178 = vmatmul.mubr.f32.gmra.mrb[0].mxu0 %v83
    %v179 = vpop.f32.mrb[0].mxu0
    %v180 = vadd.f32 %v74, %v179
    %v181 = vpop.f32.mrb[0].mxu0
    %v182 = vadd.f32 %v78, %v181
    %183 = vmatprep.mubr.f32.mxu0 0.0
    %184 = vmatmul.mubr.f32.gmra.mrb[0].mxu0 %v86
    %v185 = vpop.f32.mrb[0].mxu0
    %v186 = vadd.f32 %v74, %v185
    %v187 = vpop.f32.mrb[0].mxu0
    %v188 = vadd.f32 %v78, %v187
    %189 = vmatprep.mubr.f32.mxu0 0.0
    %190 = vmatmul.mubr.f32.gmra.mrb[0].mxu0 %v89
    %v191 = vpop.f32.mrb[0].mxu0
    %v192 = vadd.f32 %v74, %v191
    %v193 = vpop.f32.mrb[0].mxu0
    %v194 = vadd.f32 %v78, %v193
    %195 = vmatprep.mubr.f32.mxu0 0.0
    %196 = vmatmul.mubr.f32.gmra.mrb[0].mxu0 %v92
    %v197 = vpop.f32.mrb[0].mxu0
    %v198 = vadd.f32 %v74, %v197
    %v199 = vpop.f32.mrb[0].mxu0
    %v200 = vadd.f32 %v78, %v199
    %201 = vmatprep.mubr.f32.mxu0 0.0
    %202 = vmatmul.mubr.f32.gmra.mrb[0].mxu0 %v95
    %v203 = vpop.f32.mrb[0].mxu0
    %v204 = vadd.f32 %v74, %v203
    %v205 = vpop.f32.mrb[0].mxu0
    %v206 = vadd.f32 %v78, %v205
    %207 = vmatprep.mubr.f32.mxu0 0.0
    %208 = vmatmul.mubr.f32.gmra.mrb[0].mxu0 %v98
    %v209 = vpop.f32.mrb[0].mxu0
    %v210 = vadd.f32 %v74, %v209
    %v211 = vpop.f32.mrb[0].mxu0
    %v212 = vadd.f32 %v78, %v211
    %213 = vmatprep.mubr.f32.mxu0 0.0
    %214 = vmatmul.mubr.f32.gmra.mrb[0].mxu0 %v101
    %v215 = vpop.f32.mrb[0].mxu0
    %v216 = vadd.f32 %v74, %v215
    %v217 = vpop.f32.mrb[0].mxu0
    %v218 = vadd.f32 %v78, %v217
    %219 = vmatprep.mubr.f32.mxu0 0.0
    %220 = vmatmul.mubr.f32.gmra.mrb[0].mxu0 %v104
    %v221 = vpop.f32.mrb[0].mxu0
    %v222 = vadd.f32 %v74, %v221
    %v223 = vpop.f32.mrb[0].mxu0
    %v224 = vadd.f32 %v78, %v223
    %225 = vdwg.mxu0
    %226 = vst [vmem:[#allocation2] sm:$0xff] %v180
    %vm227 = vcmask 523264
    %228 = vst.msk [vmem:[#allocation2 + $0x8] sm:$0xff] %vm227, %v182
    %229 = vst [vmem:[#allocation2 + $0x10] sm:$0xff] %v186
    %230 = vst.msk [vmem:[#allocation2 + $0x18] sm:$0xff] %vm227, %v188
    %231 = vst [vmem:[#allocation2 + $0x20] sm:$0xff] %v192
    %232 = vst.msk [vmem:[#allocation2 + $0x28] sm:$0xff] %vm227, %v194
    %233 = vst [vmem:[#allocation2 + $0x30] sm:$0xff] %v198
    %234 = vst.msk [vmem:[#allocation2 + $0x38] sm:$0xff] %vm227, %v200
    %235 = vst [vmem:[#allocation2 + $0x40] sm:$0xff] %v204
    %236 = vst.msk [vmem:[#allocation2 + $0x48] sm:$0xff] %vm227, %v206
    %237 = vst [vmem:[#allocation2 + $0x50] sm:$0xff] %v210
    %238 = vst.msk [vmem:[#allocation2 + $0x58] sm:$0xff] %vm227, %v212
    %239 = vst [vmem:[#allocation2 + $0x60] sm:$0xff] %v216
    %240 = vst.msk [vmem:[#allocation2 + $0x68] sm:$0xff] %vm227, %v218
    %241 = vst [vmem:[#allocation2 + $0x70] sm:$0xff] %v222
    %242 = vst.msk [vmem:[#allocation2 + $0x78] sm:$0xff] %vm227, %v224
    %v243 = vld [vmem:[#allocation6] sm:$0xff]
    %v244 = vld [vmem:[#allocation6 + $0x8] sm:$0xff]
    %v245 = vld [vmem:[#allocation6 + $0x10] sm:$0xff]
    %v246 = vld [vmem:[#allocation6 + $0x18] sm:$0xff]
    %v247 = vld [vmem:[#allocation6 + $0x20] sm:$0xff]
    %v248 = vld [vmem:[#allocation6 + $0x28] sm:$0xff]
    %v249 = vld [vmem:[#allocation6 + $0x30] sm:$0xff]
    %v250 = vld [vmem:[#allocation6 + $0x38] sm:$0xff]
    %v251 = vld [vmem:[#allocation6 + $0x40] sm:$0xff]
    %v252 = vld [vmem:[#allocation6 + $0x48] sm:$0xff]
    %v253 = vld [vmem:[#allocation6 + $0x50] sm:$0xff]
    %v254 = vld [vmem:[#allocation6 + $0x58] sm:$0xff]
    %v255 = vld [vmem:[#allocation6 + $0x60] sm:$0xff]
    %v256 = vld [vmem:[#allocation6 + $0x68] sm:$0xff]
    %v257 = vld [vmem:[#allocation6 + $0x70] sm:$0xff]
    %v258 = vld [vmem:[#allocation6 + $0x78] sm:$0xff]
    %v259 = vld [vmem:[%s4] sm:$0x1]
    %v261 = vlaneseq
    %v262 = vshrl.u32 %v261, 7
    %v263 = vsub.s32 0, %v262
    %v264 = vrot.slane %v259, %v263
    %v266 = vld [vmem:[#allocation2] sm:$0xff]
    %v267 = vld [vmem:[#allocation2 + $0x8] sm:$0xff]
    %v269 = vsel %vm227, 0.0, 0
    %271 = vmatprep.subr.mxu0 %v244
    %272 = vmatpush1.msra.mxu0 %v243
    %273 = vmatprep.subr.mxu0 %v246
    %274 = vmatpush1.msra.mxu0 %v245
    %275 = vmatprep.subr.mxu0 %v248
    %276 = vmatpush1.msra.mxu0 %v247
    %277 = vmatprep.subr.mxu0 %v250
    %278 = vmatpush1.msra.mxu0 %v249
    %279 = vmatprep.subr.mxu0 %v252
    %280 = vmatpush1.msra.mxu0 %v251
    %281 = vmatprep.subr.mxu0 %v254
    %282 = vmatpush1.msra.mxu0 %v253
    %283 = vmatprep.subr.mxu0 %v256
    %284 = vmatpush1.msra.mxu0 %v255
    %285 = vmatprep.subr.mxu0 %v258
    %286 = vmatpush1.msra.mxu0 %v257
    %287 = vmatprep.subr.mxu0 0.0
    %288 = vmatpush1.msra.mxu0 0.0
    %289 = vmatprep.subr.mxu0 0.0
    %290 = vmatpush1.msra.mxu0 0.0
    %291 = vmatprep.subr.mxu0 0.0
    %292 = vmatpush1.msra.mxu0 0.0
    %293 = vmatprep.subr.mxu0 0.0
    %294 = vmatpush1.msra.mxu0 0.0
    %295 = vmatprep.subr.mxu0 0.0
    %296 = vmatpush1.msra.mxu0 0.0
    %297 = vmatprep.subr.mxu0 0.0
    %298 = vmatpush1.msra.mxu0 0.0
    %299 = vmatprep.subr.mxu0 0.0
    %300 = vmatpush1.msra.mxu0 0.0
    %301 = vmatprep.subr.mxu0 0.0
    %302 = vmatpush1.msra.mxu0 0.0
    %303 = vmatprep.subr.mxu0 0.0
    %304 = vmatpush1.msra.mxu0 0.0
    %305 = vmatprep.subr.mxu0 0.0
    %306 = vmatpush1.msra.mxu0 0.0
    %307 = vmatprep.subr.mxu0 0.0
    %308 = vmatpush1.msra.mxu0 0.0
    %309 = vmatprep.subr.mxu0 0.0
    %310 = vmatpush1.msra.mxu0 0.0
    %311 = vmatprep.subr.mxu0 0.0
    %312 = vmatpush1.msra.mxu0 0.0
    %313 = vmatprep.subr.mxu0 0.0
    %314 = vmatpush1.msra.mxu0 0.0
    %315 = vmatprep.subr.mxu0 0.0
    %316 = vmatpush1.msra.mxu0 0.0
    %317 = vmatprep.subr.mxu0 0.0
    %318 = vmatpush1.msra.mxu0 0.0
    %319 = vmatprep.subr.mxu0 0.0
    %320 = vmatpush1.msra.mxu0 0.0
    %321 = vmatprep.subr.mxu0 0.0
    %322 = vmatpush1.msra.mxu0 0.0
    %323 = vmatprep.subr.mxu0 0.0
    %324 = vmatpush1.msra.mxu0 0.0
    %325 = vmatprep.subr.mxu0 0.0
    %326 = vmatpush1.msra.mxu0 0.0
    %327 = vmatprep.subr.mxu0 0.0
    %328 = vmatpush1.msra.mxu0 0.0
    %329 = vmatprep.subr.mxu0 0.0
    %330 = vmatpush1.msra.mxu0 0.0
    %331 = vmatprep.subr.mxu0 0.0
    %332 = vmatpush1.msra.mxu0 0.0
    %333 = vmatprep.subr.mxu0 0.0
    %334 = vmatpush1.msra.mxu0 0.0
    %335 = vmatprep.mubr.f32.mxu0 0.0
    %336 = vmatmul.mubr.f32.gmra.mrb[0].mxu0 %v269
    %v337 = vpop.f32.mrb[0].mxu0
    %v338 = vadd.f32 0.0, %v337
    %v339 = vpop.f32.mrb[0].mxu0
    %v340 = vadd.f32 0.0, %v339
    %341 = vdwg.mxu0
    %v342 = vadd.f32 %v266, %v338
    %v343 = vxor.u32 %v342, 2147483648
    %v344 = vmul.f32 %v343, 1.442695
    %v345 = vpow.pop %v344
    %v346 = vadd.f32 %v345, 1.0
    %v347 = vrcp.pop %v346
    %v348 = vmul.f32 1.0, %v347
    %v349 = vadd.f32 %v340, %v264
    %v350 = vmul.f32 %v348, %v349
    %v351 = vadd.f32 %v267, %v350
    %v352 = vtanh.pop %v351
    %v353 = vsub.f32 1.0, %v348
    %355 = vrot.lane.b32.xlu0 %v352, 64
    %v356 = vpop.permute.xlu0 %355
    %v358 = vmul.f32 %v353, %v356
    %v359 = vmul.f32 %v348, 0.0
    %v360 = vadd.f32 %v358, %v359
    %s361 = scalar_lea.vmem [#allocation2], 16
    %v362 = vld [vmem:[%s361] sm:$0xff]
    %v363 = vld [vmem:[%s361 + $0x8] sm:$0xff]
    %365 = vrot.lane.b32.xlu0 %v360, 64
    %v366 = vpop.permute.xlu0 %365
    %v367 = vsel %vm227, %v366, 0
    %369 = vmatprep.subr.mxu0 %v244
    %370 = vmatpush1.msra.mxu0 %v243
    %371 = vmatprep.subr.mxu0 %v246
    %372 = vmatpush1.msra.mxu0 %v245
    %373 = vmatprep.subr.mxu0 %v248
    %374 = vmatpush1.msra.mxu0 %v247
    %375 = vmatprep.subr.mxu0 %v250
    %376 = vmatpush1.msra.mxu0 %v249
    %377 = vmatprep.subr.mxu0 %v252
    %378 = vmatpush1.msra.mxu0 %v251
    %379 = vmatprep.subr.mxu0 %v254
    %380 = vmatpush1.msra.mxu0 %v253
    %381 = vmatprep.subr.mxu0 %v256
    %382 = vmatpush1.msra.mxu0 %v255
    %383 = vmatprep.subr.mxu0 %v258
    %384 = vmatpush1.msra.mxu0 %v257
    %385 = vmatprep.subr.mxu0 0.0
    %386 = vmatpush1.msra.mxu0 0.0
    %387 = vmatprep.subr.mxu0 0.0
    %388 = vmatpush1.msra.mxu0 0.0
    %389 = vmatprep.subr.mxu0 0.0
    %390 = vmatpush1.msra.mxu0 0.0
    %391 = vmatprep.subr.mxu0 0.0
    %392 = vmatpush1.msra.mxu0 0.0
    %393 = vmatprep.subr.mxu0 0.0
    %394 = vmatpush1.msra.mxu0 0.0
    %395 = vmatprep.subr.mxu0 0.0
    %396 = vmatpush1.msra.mxu0 0.0
    %397 = vmatprep.subr.mxu0 0.0
    %398 = vmatpush1.msra.mxu0 0.0
    %399 = vmatprep.subr.mxu0 0.0
    %400 = vmatpush1.msra.mxu0 0.0
    %401 = vmatprep.subr.mxu0 0.0
    %402 = vmatpush1.msra.mxu0 0.0
    %403 = vmatprep.subr.mxu0 0.0
    %404 = vmatpush1.msra.mxu0 0.0
    %405 = vmatprep.subr.mxu0 0.0
    %406 = vmatpush1.msra.mxu0 0.0
    %407 = vmatprep.subr.mxu0 0.0
    %408 = vmatpush1.msra.mxu0 0.0
    %409 = vmatprep.subr.mxu0 0.0
    %410 = vmatpush1.msra.mxu0 0.0
    %411 = vmatprep.subr.mxu0 0.0
    %412 = vmatpush1.msra.mxu0 0.0
    %413 = vmatprep.subr.mxu0 0.0
    %414 = vmatpush1.msra.mxu0 0.0
    %415 = vmatprep.subr.mxu0 0.0
    %416 = vmatpush1.msra.mxu0 0.0
    %417 = vmatprep.subr.mxu0 0.0
    %418 = vmatpush1.msra.mxu0 0.0
    %419 = vmatprep.subr.mxu0 0.0
    %420 = vmatpush1.msra.mxu0 0.0
    %421 = vmatprep.subr.mxu0 0.0
    %422 = vmatpush1.msra.mxu0 0.0
    %423 = vmatprep.subr.mxu0 0.0
    %424 = vmatpush1.msra.mxu0 0.0
    %425 = vmatprep.subr.mxu0 0.0
    %426 = vmatpush1.msra.mxu0 0.0
    %427 = vmatprep.subr.mxu0 0.0
    %428 = vmatpush1.msra.mxu0 0.0
    %429 = vmatprep.subr.mxu0 0.0
    %430 = vmatpush1.msra.mxu0 0.0
    %431 = vmatprep.subr.mxu0 0.0
    %432 = vmatpush1.msra.mxu0 0.0
    %433 = vmatprep.mubr.f32.mxu0 0.0
    %434 = vmatmul.mubr.f32.gmra.mrb[0].mxu0 %v367
    %v435 = vpop.f32.mrb[0].mxu0
    %v436 = vadd.f32 0.0, %v435
    %v437 = vpop.f32.mrb[0].mxu0
    %v438 = vadd.f32 0.0, %v437
    %439 = vdwg.mxu0
    %v440 = vadd.f32 %v362, %v436
    %v441 = vxor.u32 %v440, 2147483648
    %v442 = vmul.f32 %v441, 1.442695
    %v443 = vpow.pop %v442
    %v444 = vadd.f32 %v443, 1.0
    %v445 = vrcp.pop %v444
    %v446 = vmul.f32 1.0, %v445
    %v447 = vadd.f32 %v438, %v264
    %v448 = vmul.f32 %v446, %v447
    %v449 = vadd.f32 %v363, %v448
    %v450 = vtanh.pop %v449
    %v451 = vsub.f32 1.0, %v446
    %453 = vrot.lane.b32.xlu0 %v450, 64
    %v454 = vpop.permute.xlu0 %453
    %v456 = vmul.f32 %v451, %v454
    %v457 = vmul.f32 %v446, %v360
    %v458 = vadd.f32 %v456, %v457
    %s459 = scalar_lea.vmem [#allocation2], 32
    %v460 = vld [vmem:[%s459] sm:$0xff]
    %v461 = vld [vmem:[%s459 + $0x8] sm:$0xff]
    %463 = vrot.lane.b32.xlu0 %v458, 64
    %v464 = vpop.permute.xlu0 %463
    %v465 = vsel %vm227, %v464, 0
    %467 = vmatprep.subr.mxu0 %v244
    %468 = vmatpush1.msra.mxu0 %v243
    %469 = vmatprep.subr.mxu0 %v246
    %470 = vmatpush1.msra.mxu0 %v245
    %471 = vmatprep.subr.mxu0 %v248
    %472 = vmatpush1.msra.mxu0 %v247
    %473 = vmatprep.subr.mxu0 %v250
    %474 = vmatpush1.msra.mxu0 %v249
    %475 = vmatprep.subr.mxu0 %v252
    %476 = vmatpush1.msra.mxu0 %v251
    %477 = vmatprep.subr.mxu0 %v254
    %478 = vmatpush1.msra.mxu0 %v253
    %479 = vmatprep.subr.mxu0 %v256
    %480 = vmatpush1.msra.mxu0 %v255
    %481 = vmatprep.subr.mxu0 %v258
    %482 = vmatpush1.msra.mxu0 %v257
    %483 = vmatprep.subr.mxu0 0.0
    %484 = vmatpush1.msra.mxu0 0.0
    %485 = vmatprep.subr.mxu0 0.0
    %486 = vmatpush1.msra.mxu0 0.0
    %487 = vmatprep.subr.mxu0 0.0
    %488 = vmatpush1.msra.mxu0 0.0
    %489 = vmatprep.subr.mxu0 0.0
    %490 = vmatpush1.msra.mxu0 0.0
    %491 = vmatprep.subr.mxu0 0.0
    %492 = vmatpush1.msra.mxu0 0.0
    %493 = vmatprep.subr.mxu0 0.0
    %494 = vmatpush1.msra.mxu0 0.0
    %495 = vmatprep.subr.mxu0 0.0
    %496 = vmatpush1.msra.mxu0 0.0
    %497 = vmatprep.subr.mxu0 0.0
    %498 = vmatpush1.msra.mxu0 0.0
    %499 = vmatprep.subr.mxu0 0.0
    %500 = vmatpush1.msra.mxu0 0.0
    %501 = vmatprep.subr.mxu0 0.0
    %502 = vmatpush1.msra.mxu0 0.0
    %503 = vmatprep.subr.mxu0 0.0
    %504 = vmatpush1.msra.mxu0 0.0
    %505 = vmatprep.subr.mxu0 0.0
    %506 = vmatpush1.msra.mxu0 0.0
    %507 = vmatprep.subr.mxu0 0.0
    %508 = vmatpush1.msra.mxu0 0.0
    %509 = vmatprep.subr.mxu0 0.0
    %510 = vmatpush1.msra.mxu0 0.0
    %511 = vmatprep.subr.mxu0 0.0
    %512 = vmatpush1.msra.mxu0 0.0
    %513 = vmatprep.subr.mxu0 0.0
    %514 = vmatpush1.msra.mxu0 0.0
    %515 = vmatprep.subr.mxu0 0.0
    %516 = vmatpush1.msra.mxu0 0.0
    %517 = vmatprep.subr.mxu0 0.0
    %518 = vmatpush1.msra.mxu0 0.0
    %519 = vmatprep.subr.mxu0 0.0
    %520 = vmatpush1.msra.mxu0 0.0
    %521 = vmatprep.subr.mxu0 0.0
    %522 = vmatpush1.msra.mxu0 0.0
    %523 = vmatprep.subr.mxu0 0.0
    %524 = vmatpush1.msra.mxu0 0.0
    %525 = vmatprep.subr.mxu0 0.0
    %526 = vmatpush1.msra.mxu0 0.0
    %527 = vmatprep.subr.mxu0 0.0
    %528 = vmatpush1.msra.mxu0 0.0
    %529 = vmatprep.subr.mxu0 0.0
    %530 = vmatpush1.msra.mxu0 0.0
    %531 = vmatprep.mubr.f32.mxu0 0.0
    %532 = vmatmul.mubr.f32.gmra.mrb[0].mxu0 %v465
    %v533 = vpop.f32.mrb[0].mxu0
    %v534 = vadd.f32 0.0, %v533
    %v535 = vpop.f32.mrb[0].mxu0
    %v536 = vadd.f32 0.0, %v535
    %537 = vdwg.mxu0
    %v538 = vadd.f32 %v460, %v534
    %v539 = vxor.u32 %v538, 2147483648
    %v540 = vmul.f32 %v539, 1.442695
    %v541 = vpow.pop %v540
    %v542 = vadd.f32 %v541, 1.0
    %v543 = vrcp.pop %v542
    %v544 = vmul.f32 1.0, %v543
    %v545 = vadd.f32 %v536, %v264
    %v546 = vmul.f32 %v544, %v545
    %v547 = vadd.f32 %v461, %v546
    %v548 = vtanh.pop %v547
    %v549 = vsub.f32 1.0, %v544
    %551 = vrot.lane.b32.xlu0 %v548, 64
    %v552 = vpop.permute.xlu0 %551
    %v554 = vmul.f32 %v549, %v552
    %v555 = vmul.f32 %v544, %v458
    %v556 = vadd.f32 %v554, %v555
    %s557 = scalar_lea.vmem [#allocation2], 48
    %v558 = vld [vmem:[%s557] sm:$0xff]
    %v559 = vld [vmem:[%s557 + $0x8] sm:$0xff]
    %561 = vrot.lane.b32.xlu0 %v556, 64
    %v562 = vpop.permute.xlu0 %561
    %v563 = vsel %vm227, %v562, 0
    %565 = vmatprep.subr.mxu0 %v244
    %566 = vmatpush1.msra.mxu0 %v243
    %567 = vmatprep.subr.mxu0 %v246
    %568 = vmatpush1.msra.mxu0 %v245
    %569 = vmatprep.subr.mxu0 %v248
    %570 = vmatpush1.msra.mxu0 %v247
    %571 = vmatprep.subr.mxu0 %v250
    %572 = vmatpush1.msra.mxu0 %v249
    %573 = vmatprep.subr.mxu0 %v252
    %574 = vmatpush1.msra.mxu0 %v251
    %575 = vmatprep.subr.mxu0 %v254
    %576 = vmatpush1.msra.mxu0 %v253
    %577 = vmatprep.subr.mxu0 %v256
    %578 = vmatpush1.msra.mxu0 %v255
    %579 = vmatprep.subr.mxu0 %v258
    %580 = vmatpush1.msra.mxu0 %v257
    %581 = vmatprep.subr.mxu0 0.0
    %582 = vmatpush1.msra.mxu0 0.0
    %583 = vmatprep.subr.mxu0 0.0
    %584 = vmatpush1.msra.mxu0 0.0
    %585 = vmatprep.subr.mxu0 0.0
    %586 = vmatpush1.msra.mxu0 0.0
    %587 = vmatprep.subr.mxu0 0.0
    %588 = vmatpush1.msra.mxu0 0.0
    %589 = vmatprep.subr.mxu0 0.0
    %590 = vmatpush1.msra.mxu0 0.0
    %591 = vmatprep.subr.mxu0 0.0
    %592 = vmatpush1.msra.mxu0 0.0
    %593 = vmatprep.subr.mxu0 0.0
    %594 = vmatpush1.msra.mxu0 0.0
    %595 = vmatprep.subr.mxu0 0.0
    %596 = vmatpush1.msra.mxu0 0.0
    %597 = vmatprep.subr.mxu0 0.0
    %598 = vmatpush1.msra.mxu0 0.0
    %599 = vmatprep.subr.mxu0 0.0
    %600 = vmatpush1.msra.mxu0 0.0
    %601 = vmatprep.subr.mxu0 0.0
    %602 = vmatpush1.msra.mxu0 0.0
    %603 = vmatprep.subr.mxu0 0.0
    %604 = vmatpush1.msra.mxu0 0.0
    %605 = vmatprep.subr.mxu0 0.0
    %606 = vmatpush1.msra.mxu0 0.0
    %607 = vmatprep.subr.mxu0 0.0
    %608 = vmatpush1.msra.mxu0 0.0
    %609 = vmatprep.subr.mxu0 0.0
    %610 = vmatpush1.msra.mxu0 0.0
    %611 = vmatprep.subr.mxu0 0.0
    %612 = vmatpush1.msra.mxu0 0.0
    %613 = vmatprep.subr.mxu0 0.0
    %614 = vmatpush1.msra.mxu0 0.0
    %615 = vmatprep.subr.mxu0 0.0
    %616 = vmatpush1.msra.mxu0 0.0
    %617 = vmatprep.subr.mxu0 0.0
    %618 = vmatpush1.msra.mxu0 0.0
    %619 = vmatprep.subr.mxu0 0.0
    %620 = vmatpush1.msra.mxu0 0.0
    %621 = vmatprep.subr.mxu0 0.0
    %622 = vmatpush1.msra.mxu0 0.0
    %623 = vmatprep.subr.mxu0 0.0
    %624 = vmatpush1.msra.mxu0 0.0
    %625 = vmatprep.subr.mxu0 0.0
    %626 = vmatpush1.msra.mxu0 0.0
    %627 = vmatprep.subr.mxu0 0.0
    %628 = vmatpush1.msra.mxu0 0.0
    %629 = vmatprep.mubr.f32.mxu0 0.0
    %630 = vmatmul.mubr.f32.gmra.mrb[0].mxu0 %v563
    %v631 = vpop.f32.mrb[0].mxu0
    %v632 = vadd.f32 0.0, %v631
    %v633 = vpop.f32.mrb[0].mxu0
    %v634 = vadd.f32 0.0, %v633
    %635 = vdwg.mxu0
    %v636 = vadd.f32 %v558, %v632
    %v637 = vxor.u32 %v636, 2147483648
    %v638 = vmul.f32 %v637, 1.442695
    %v639 = vpow.pop %v638
    %v640 = vadd.f32 %v639, 1.0
    %v641 = vrcp.pop %v640
    %v642 = vmul.f32 1.0, %v641
    %v643 = vadd.f32 %v634, %v264
    %v644 = vmul.f32 %v642, %v643
    %v645 = vadd.f32 %v559, %v644
    %v646 = vtanh.pop %v645
    %v647 = vsub.f32 1.0, %v642
    %649 = vrot.lane.b32.xlu0 %v646, 64
    %v650 = vpop.permute.xlu0 %649
    %v652 = vmul.f32 %v647, %v650
    %v653 = vmul.f32 %v642, %v556
    %v654 = vadd.f32 %v652, %v653
    %s655 = scalar_lea.vmem [#allocation2], 64
    %v656 = vld [vmem:[%s655] sm:$0xff]
    %v657 = vld [vmem:[%s655 + $0x8] sm:$0xff]
    %659 = vrot.lane.b32.xlu0 %v654, 64
    %v660 = vpop.permute.xlu0 %659
    %v661 = vsel %vm227, %v660, 0
    %663 = vmatprep.subr.mxu0 %v244
    %664 = vmatpush1.msra.mxu0 %v243
    %665 = vmatprep.subr.mxu0 %v246
    %666 = vmatpush1.msra.mxu0 %v245
    %667 = vmatprep.subr.mxu0 %v248
    %668 = vmatpush1.msra.mxu0 %v247
    %669 = vmatprep.subr.mxu0 %v250
    %670 = vmatpush1.msra.mxu0 %v249
    %671 = vmatprep.subr.mxu0 %v252
    %672 = vmatpush1.msra.mxu0 %v251
    %673 = vmatprep.subr.mxu0 %v254
    %674 = vmatpush1.msra.mxu0 %v253
    %675 = vmatprep.subr.mxu0 %v256
    %676 = vmatpush1.msra.mxu0 %v255
    %677 = vmatprep.subr.mxu0 %v258
    %678 = vmatpush1.msra.mxu0 %v257
    %679 = vmatprep.subr.mxu0 0.0
    %680 = vmatpush1.msra.mxu0 0.0
    %681 = vmatprep.subr.mxu0 0.0
    %682 = vmatpush1.msra.mxu0 0.0
    %683 = vmatprep.subr.mxu0 0.0
    %684 = vmatpush1.msra.mxu0 0.0
    %685 = vmatprep.subr.mxu0 0.0
    %686 = vmatpush1.msra.mxu0 0.0
    %687 = vmatprep.subr.mxu0 0.0
    %688 = vmatpush1.msra.mxu0 0.0
    %689 = vmatprep.subr.mxu0 0.0
    %690 = vmatpush1.msra.mxu0 0.0
    %691 = vmatprep.subr.mxu0 0.0
    %692 = vmatpush1.msra.mxu0 0.0
    %693 = vmatprep.subr.mxu0 0.0
    %694 = vmatpush1.msra.mxu0 0.0
    %695 = vmatprep.subr.mxu0 0.0
    %696 = vmatpush1.msra.mxu0 0.0
    %697 = vmatprep.subr.mxu0 0.0
    %698 = vmatpush1.msra.mxu0 0.0
    %699 = vmatprep.subr.mxu0 0.0
    %700 = vmatpush1.msra.mxu0 0.0
    %701 = vmatprep.subr.mxu0 0.0
    %702 = vmatpush1.msra.mxu0 0.0
    %703 = vmatprep.subr.mxu0 0.0
    %704 = vmatpush1.msra.mxu0 0.0
    %705 = vmatprep.subr.mxu0 0.0
    %706 = vmatpush1.msra.mxu0 0.0
    %707 = vmatprep.subr.mxu0 0.0
    %708 = vmatpush1.msra.mxu0 0.0
    %709 = vmatprep.subr.mxu0 0.0
    %710 = vmatpush1.msra.mxu0 0.0
    %711 = vmatprep.subr.mxu0 0.0
    %712 = vmatpush1.msra.mxu0 0.0
    %713 = vmatprep.subr.mxu0 0.0
    %714 = vmatpush1.msra.mxu0 0.0
    %715 = vmatprep.subr.mxu0 0.0
    %716 = vmatpush1.msra.mxu0 0.0
    %717 = vmatprep.subr.mxu0 0.0
    %718 = vmatpush1.msra.mxu0 0.0
    %719 = vmatprep.subr.mxu0 0.0
    %720 = vmatpush1.msra.mxu0 0.0
    %721 = vmatprep.subr.mxu0 0.0
    %722 = vmatpush1.msra.mxu0 0.0
    %723 = vmatprep.subr.mxu0 0.0
    %724 = vmatpush1.msra.mxu0 0.0
    %725 = vmatprep.subr.mxu0 0.0
    %726 = vmatpush1.msra.mxu0 0.0
    %727 = vmatprep.mubr.f32.mxu0 0.0
    %728 = vmatmul.mubr.f32.gmra.mrb[0].mxu0 %v661
    %v729 = vpop.f32.mrb[0].mxu0
    %v730 = vadd.f32 0.0, %v729
    %v731 = vpop.f32.mrb[0].mxu0
    %v732 = vadd.f32 0.0, %v731
    %733 = vdwg.mxu0
    %v734 = vadd.f32 %v656, %v730
    %v735 = vxor.u32 %v734, 2147483648
    %v736 = vmul.f32 %v735, 1.442695
    %v737 = vpow.pop %v736
    %v738 = vadd.f32 %v737, 1.0
    %v739 = vrcp.pop %v738
    %v740 = vmul.f32 1.0, %v739
    %v741 = vadd.f32 %v732, %v264
    %v742 = vmul.f32 %v740, %v741
    %v743 = vadd.f32 %v657, %v742
    %v744 = vtanh.pop %v743
    %v745 = vsub.f32 1.0, %v740
    %747 = vrot.lane.b32.xlu0 %v744, 64
    %v748 = vpop.permute.xlu0 %747
    %v750 = vmul.f32 %v745, %v748
    %v751 = vmul.f32 %v740, %v654
    %v752 = vadd.f32 %v750, %v751
    %s753 = scalar_lea.vmem [#allocation2], 80
    %v754 = vld [vmem:[%s753] sm:$0xff]
    %v755 = vld [vmem:[%s753 + $0x8] sm:$0xff]
    %757 = vrot.lane.b32.xlu0 %v752, 64
    %v758 = vpop.permute.xlu0 %757
    %v759 = vsel %vm227, %v758, 0
    %761 = vmatprep.subr.mxu0 %v244
    %762 = vmatpush1.msra.mxu0 %v243
    %763 = vmatprep.subr.mxu0 %v246
    %764 = vmatpush1.msra.mxu0 %v245
    %765 = vmatprep.subr.mxu0 %v248
    %766 = vmatpush1.msra.mxu0 %v247
    %767 = vmatprep.subr.mxu0 %v250
    %768 = vmatpush1.msra.mxu0 %v249
    %769 = vmatprep.subr.mxu0 %v252
    %770 = vmatpush1.msra.mxu0 %v251
    %771 = vmatprep.subr.mxu0 %v254
    %772 = vmatpush1.msra.mxu0 %v253
    %773 = vmatprep.subr.mxu0 %v256
    %774 = vmatpush1.msra.mxu0 %v255
    %775 = vmatprep.subr.mxu0 %v258
    %776 = vmatpush1.msra.mxu0 %v257
    %777 = vmatprep.subr.mxu0 0.0
    %778 = vmatpush1.msra.mxu0 0.0
    %779 = vmatprep.subr.mxu0 0.0
    %780 = vmatpush1.msra.mxu0 0.0
    %781 = vmatprep.subr.mxu0 0.0
    %782 = vmatpush1.msra.mxu0 0.0
    %783 = vmatprep.subr.mxu0 0.0
    %784 = vmatpush1.msra.mxu0 0.0
    %785 = vmatprep.subr.mxu0 0.0
    %786 = vmatpush1.msra.mxu0 0.0
    %787 = vmatprep.subr.mxu0 0.0
    %788 = vmatpush1.msra.mxu0 0.0
    %789 = vmatprep.subr.mxu0 0.0
    %790 = vmatpush1.msra.mxu0 0.0
    %791 = vmatprep.subr.mxu0 0.0
    %792 = vmatpush1.msra.mxu0 0.0
    %793 = vmatprep.subr.mxu0 0.0
    %794 = vmatpush1.msra.mxu0 0.0
    %795 = vmatprep.subr.mxu0 0.0
    %796 = vmatpush1.msra.mxu0 0.0
    %797 = vmatprep.subr.mxu0 0.0
    %798 = vmatpush1.msra.mxu0 0.0
    %799 = vmatprep.subr.mxu0 0.0
    %800 = vmatpush1.msra.mxu0 0.0
    %801 = vmatprep.subr.mxu0 0.0
    %802 = vmatpush1.msra.mxu0 0.0
    %803 = vmatprep.subr.mxu0 0.0
    %804 = vmatpush1.msra.mxu0 0.0
    %805 = vmatprep.subr.mxu0 0.0
    %806 = vmatpush1.msra.mxu0 0.0
    %807 = vmatprep.subr.mxu0 0.0
    %808 = vmatpush1.msra.mxu0 0.0
    %809 = vmatprep.subr.mxu0 0.0
    %810 = vmatpush1.msra.mxu0 0.0
    %811 = vmatprep.subr.mxu0 0.0
    %812 = vmatpush1.msra.mxu0 0.0
    %813 = vmatprep.subr.mxu0 0.0
    %814 = vmatpush1.msra.mxu0 0.0
    %815 = vmatprep.subr.mxu0 0.0
    %816 = vmatpush1.msra.mxu0 0.0
    %817 = vmatprep.subr.mxu0 0.0
    %818 = vmatpush1.msra.mxu0 0.0
    %819 = vmatprep.subr.mxu0 0.0
    %820 = vmatpush1.msra.mxu0 0.0
    %821 = vmatprep.subr.mxu0 0.0
    %822 = vmatpush1.msra.mxu0 0.0
    %823 = vmatprep.subr.mxu0 0.0
    %824 = vmatpush1.msra.mxu0 0.0
    %825 = vmatprep.mubr.f32.mxu0 0.0
    %826 = vmatmul.mubr.f32.gmra.mrb[0].mxu0 %v759
    %v827 = vpop.f32.mrb[0].mxu0
    %v828 = vadd.f32 0.0, %v827
    %v829 = vpop.f32.mrb[0].mxu0
    %v830 = vadd.f32 0.0, %v829
    %831 = vdwg.mxu0
    %v832 = vadd.f32 %v754, %v828
    %v833 = vxor.u32 %v832, 2147483648
    %v834 = vmul.f32 %v833, 1.442695
    %v835 = vpow.pop %v834
    %v836 = vadd.f32 %v835, 1.0
    %v837 = vrcp.pop %v836
    %v838 = vmul.f32 1.0, %v837
    %v839 = vadd.f32 %v830, %v264
    %v840 = vmul.f32 %v838, %v839
    %v841 = vadd.f32 %v755, %v840
    %v842 = vtanh.pop %v841
    %v843 = vsub.f32 1.0, %v838
    %845 = vrot.lane.b32.xlu0 %v842, 64
    %v846 = vpop.permute.xlu0 %845
    %v848 = vmul.f32 %v843, %v846
    %v849 = vmul.f32 %v838, %v752
    %v850 = vadd.f32 %v848, %v849
    %s851 = scalar_lea.vmem [#allocation2], 96
    %v852 = vld [vmem:[%s851] sm:$0xff]
    %v853 = vld [vmem:[%s851 + $0x8] sm:$0xff]
    %855 = vrot.lane.b32.xlu0 %v850, 64
    %v856 = vpop.permute.xlu0 %855
    %v857 = vsel %vm227, %v856, 0
    %859 = vmatprep.subr.mxu0 %v244
    %860 = vmatpush1.msra.mxu0 %v243
    %861 = vmatprep.subr.mxu0 %v246
    %862 = vmatpush1.msra.mxu0 %v245
    %863 = vmatprep.subr.mxu0 %v248
    %864 = vmatpush1.msra.mxu0 %v247
    %865 = vmatprep.subr.mxu0 %v250
    %866 = vmatpush1.msra.mxu0 %v249
    %867 = vmatprep.subr.mxu0 %v252
    %868 = vmatpush1.msra.mxu0 %v251
    %869 = vmatprep.subr.mxu0 %v254
    %870 = vmatpush1.msra.mxu0 %v253
    %871 = vmatprep.subr.mxu0 %v256
    %872 = vmatpush1.msra.mxu0 %v255
    %873 = vmatprep.subr.mxu0 %v258
    %874 = vmatpush1.msra.mxu0 %v257
    %875 = vmatprep.subr.mxu0 0.0
    %876 = vmatpush1.msra.mxu0 0.0
    %877 = vmatprep.subr.mxu0 0.0
    %878 = vmatpush1.msra.mxu0 0.0
    %879 = vmatprep.subr.mxu0 0.0
    %880 = vmatpush1.msra.mxu0 0.0
    %881 = vmatprep.subr.mxu0 0.0
    %882 = vmatpush1.msra.mxu0 0.0
    %883 = vmatprep.subr.mxu0 0.0
    %884 = vmatpush1.msra.mxu0 0.0
    %885 = vmatprep.subr.mxu0 0.0
    %886 = vmatpush1.msra.mxu0 0.0
    %887 = vmatprep.subr.mxu0 0.0
    %888 = vmatpush1.msra.mxu0 0.0
    %889 = vmatprep.subr.mxu0 0.0
    %890 = vmatpush1.msra.mxu0 0.0
    %891 = vmatprep.subr.mxu0 0.0
    %892 = vmatpush1.msra.mxu0 0.0
    %893 = vmatprep.subr.mxu0 0.0
    %894 = vmatpush1.msra.mxu0 0.0
    %895 = vmatprep.subr.mxu0 0.0
    %896 = vmatpush1.msra.mxu0 0.0
    %897 = vmatprep.subr.mxu0 0.0
    %898 = vmatpush1.msra.mxu0 0.0
    %899 = vmatprep.subr.mxu0 0.0
    %900 = vmatpush1.msra.mxu0 0.0
    %901 = vmatprep.subr.mxu0 0.0
    %902 = vmatpush1.msra.mxu0 0.0
    %903 = vmatprep.subr.mxu0 0.0
    %904 = vmatpush1.msra.mxu0 0.0
    %905 = vmatprep.subr.mxu0 0.0
    %906 = vmatpush1.msra.mxu0 0.0
    %907 = vmatprep.subr.mxu0 0.0
    %908 = vmatpush1.msra.mxu0 0.0
    %909 = vmatprep.subr.mxu0 0.0
    %910 = vmatpush1.msra.mxu0 0.0
    %911 = vmatprep.subr.mxu0 0.0
    %912 = vmatpush1.msra.mxu0 0.0
    %913 = vmatprep.subr.mxu0 0.0
    %914 = vmatpush1.msra.mxu0 0.0
    %915 = vmatprep.subr.mxu0 0.0
    %916 = vmatpush1.msra.mxu0 0.0
    %917 = vmatprep.subr.mxu0 0.0
    %918 = vmatpush1.msra.mxu0 0.0
    %919 = vmatprep.subr.mxu0 0.0
    %920 = vmatpush1.msra.mxu0 0.0
    %921 = vmatprep.subr.mxu0 0.0
    %922 = vmatpush1.msra.mxu0 0.0
    %923 = vmatprep.mubr.f32.mxu0 0.0
    %924 = vmatmul.mubr.f32.gmra.mrb[0].mxu0 %v857
    %v925 = vpop.f32.mrb[0].mxu0
    %v926 = vadd.f32 0.0, %v925
    %v927 = vpop.f32.mrb[0].mxu0
    %v928 = vadd.f32 0.0, %v927
    %929 = vdwg.mxu0
    %v930 = vadd.f32 %v852, %v926
    %v931 = vxor.u32 %v930, 2147483648
    %v932 = vmul.f32 %v931, 1.442695
    %v933 = vpow.pop %v932
    %v934 = vadd.f32 %v933, 1.0
    %v935 = vrcp.pop %v934
    %v936 = vmul.f32 1.0, %v935
    %v937 = vadd.f32 %v928, %v264
    %v938 = vmul.f32 %v936, %v937
    %v939 = vadd.f32 %v853, %v938
    %v940 = vtanh.pop %v939
    %v941 = vsub.f32 1.0, %v936
    %943 = vrot.lane.b32.xlu0 %v940, 64
    %v944 = vpop.permute.xlu0 %943
    %v946 = vmul.f32 %v941, %v944
    %v947 = vmul.f32 %v936, %v850
    %v948 = vadd.f32 %v946, %v947
    %s949 = scalar_lea.vmem [#allocation2], 112
    %v950 = vld [vmem:[%s949] sm:$0xff]
    %v951 = vld [vmem:[%s949 + $0x8] sm:$0xff]
    %953 = vrot.lane.b32.xlu0 %v948, 64
    %v954 = vpop.permute.xlu0 %953
    %v955 = vsel %vm227, %v954, 0
    %957 = vmatprep.subr.mxu0 %v244
    %958 = vmatpush1.msra.mxu0 %v243
    %959 = vmatprep.subr.mxu0 %v246
    %960 = vmatpush1.msra.mxu0 %v245
    %961 = vmatprep.subr.mxu0 %v248
    %962 = vmatpush1.msra.mxu0 %v247
    %963 = vmatprep.subr.mxu0 %v250
    %964 = vmatpush1.msra.mxu0 %v249
    %965 = vmatprep.subr.mxu0 %v252
    %966 = vmatpush1.msra.mxu0 %v251
    %967 = vmatprep.subr.mxu0 %v254
    %968 = vmatpush1.msra.mxu0 %v253
    %969 = vmatprep.subr.mxu0 %v256
    %970 = vmatpush1.msra.mxu0 %v255
    %971 = vmatprep.subr.mxu0 %v258
    %972 = vmatpush1.msra.mxu0 %v257
    %973 = vmatprep.subr.mxu0 0.0
    %974 = vmatpush1.msra.mxu0 0.0
    %975 = vmatprep.subr.mxu0 0.0
    %976 = vmatpush1.msra.mxu0 0.0
    %977 = vmatprep.subr.mxu0 0.0
    %978 = vmatpush1.msra.mxu0 0.0
    %979 = vmatprep.subr.mxu0 0.0
    %980 = vmatpush1.msra.mxu0 0.0
    %981 = vmatprep.subr.mxu0 0.0
    %982 = vmatpush1.msra.mxu0 0.0
    %983 = vmatprep.subr.mxu0 0.0
    %984 = vmatpush1.msra.mxu0 0.0
    %985 = vmatprep.subr.mxu0 0.0
    %986 = vmatpush1.msra.mxu0 0.0
    %987 = vmatprep.subr.mxu0 0.0
    %988 = vmatpush1.msra.mxu0 0.0
    %989 = vmatprep.subr.mxu0 0.0
    %990 = vmatpush1.msra.mxu0 0.0
    %991 = vmatprep.subr.mxu0 0.0
    %992 = vmatpush1.msra.mxu0 0.0
    %993 = vmatprep.subr.mxu0 0.0
    %994 = vmatpush1.msra.mxu0 0.0
    %995 = vmatprep.subr.mxu0 0.0
    %996 = vmatpush1.msra.mxu0 0.0
    %997 = vmatprep.subr.mxu0 0.0
    %998 = vmatpush1.msra.mxu0 0.0
    %999 = vmatprep.subr.mxu0 0.0
    %1000 = vmatpush1.msra.mxu0 0.0
    %1001 = vmatprep.subr.mxu0 0.0
    %1002 = vmatpush1.msra.mxu0 0.0
    %1003 = vmatprep.subr.mxu0 0.0
    %1004 = vmatpush1.msra.mxu0 0.0
    %1005 = vmatprep.subr.mxu0 0.0
    %1006 = vmatpush1.msra.mxu0 0.0
    %1007 = vmatprep.subr.mxu0 0.0
    %1008 = vmatpush1.msra.mxu0 0.0
    %1009 = vmatprep.subr.mxu0 0.0
    %1010 = vmatpush1.msra.mxu0 0.0
    %1011 = vmatprep.subr.mxu0 0.0
    %1012 = vmatpush1.msra.mxu0 0.0
    %1013 = vmatprep.subr.mxu0 0.0
    %1014 = vmatpush1.msra.mxu0 0.0
    %1015 = vmatprep.subr.mxu0 0.0
    %1016 = vmatpush1.msra.mxu0 0.0
    %1017 = vmatprep.subr.mxu0 0.0
    %1018 = vmatpush1.msra.mxu0 0.0
    %1019 = vmatprep.subr.mxu0 0.0
    %1020 = vmatpush1.msra.mxu0 0.0
    %1021 = vmatprep.mubr.f32.mxu0 0.0
    %1022 = vmatmul.mubr.f32.gmra.mrb[0].mxu0 %v955
    %v1023 = vpop.f32.mrb[0].mxu0
    %v1024 = vadd.f32 0.0, %v1023
    %v1025 = vpop.f32.mrb[0].mxu0
    %v1026 = vadd.f32 0.0, %v1025
    %1027 = vdwg.mxu0
    %v1028 = vadd.f32 %v950, %v1024
    %v1029 = vxor.u32 %v1028, 2147483648
    %v1030 = vmul.f32 %v1029, 1.442695
    %v1031 = vpow.pop %v1030
    %v1032 = vadd.f32 %v1031, 1.0
    %v1033 = vrcp.pop %v1032
    %v1034 = vmul.f32 1.0, %v1033
    %v1035 = vadd.f32 %v1026, %v264
    %v1036 = vmul.f32 %v1034, %v1035
    %v1037 = vadd.f32 %v951, %v1036
    %v1038 = vtanh.pop %v1037
    %v1039 = vsub.f32 1.0, %v1034
    %1041 = vrot.lane.b32.xlu0 %v1038, 64
    %v1042 = vpop.permute.xlu0 %1041
    %v1044 = vmul.f32 %v1039, %v1042
    %v1045 = vmul.f32 %v1034, %v948
    %v1046 = vadd.f32 %v1044, %v1045
    %v1047 = vld [vmem:[%s5] sm:$0xff]
    %v1048 = vld [vmem:[%s5 + $0x8] sm:$0xff]
    %v1049 = vld [vmem:[%s5 + $0x10] sm:$0xff]
    %v1050 = vld [vmem:[%s5 + $0x18] sm:$0xff]
    %v1051 = vld [vmem:[%s5 + $0x20] sm:$0xff]
    %v1052 = vld [vmem:[%s5 + $0x28] sm:$0xff]
    %v1053 = vld [vmem:[%s5 + $0x30] sm:$0xff]
    %v1054 = vld [vmem:[%s5 + $0x38] sm:$0xff]
    %v1055 = vld [vmem:[%s6] sm:$0x1]
    %v1057 = vlaneseq
    %v1058 = vshrl.u32 %v1057, 7
    %v1059 = vsub.s32 0, %v1058
    %v1060 = vrot.slane %v1055, %v1059
    %1063 = vrot.lane.b32.xlu0 %v1046, 64
    %v1064 = vpop.permute.xlu0 %1063
    %v1065 = vsel %vm227, %v1064, 0
    %1067 = vmatprep.subr.mxu0 0.0
    %1068 = vmatpush1.msra.mxu0 %v1047
    %1069 = vmatprep.subr.mxu0 0.0
    %1070 = vmatpush1.msra.mxu0 %v1048
    %1071 = vmatprep.subr.mxu0 0.0
    %1072 = vmatpush1.msra.mxu0 %v1049
    %1073 = vmatprep.subr.mxu0 0.0
    %1074 = vmatpush1.msra.mxu0 %v1050
    %1075 = vmatprep.subr.mxu0 0.0
    %1076 = vmatpush1.msra.mxu0 %v1051
    %1077 = vmatprep.subr.mxu0 0.0
    %1078 = vmatpush1.msra.mxu0 %v1052
    %1079 = vmatprep.subr.mxu0 0.0
    %1080 = vmatpush1.msra.mxu0 %v1053
    %1081 = vmatprep.subr.mxu0 0.0
    %1082 = vmatpush1.msra.mxu0 %v1054
    %1083 = vmatprep.subr.mxu0 0.0
    %1084 = vmatpush1.msra.mxu0 0.0
    %1085 = vmatprep.subr.mxu0 0.0
    %1086 = vmatpush1.msra.mxu0 0.0
    %1087 = vmatprep.subr.mxu0 0.0
    %1088 = vmatpush1.msra.mxu0 0.0
    %1089 = vmatprep.subr.mxu0 0.0
    %1090 = vmatpush1.msra.mxu0 0.0
    %1091 = vmatprep.subr.mxu0 0.0
    %1092 = vmatpush1.msra.mxu0 0.0
    %1093 = vmatprep.subr.mxu0 0.0
    %1094 = vmatpush1.msra.mxu0 0.0
    %1095 = vmatprep.subr.mxu0 0.0
    %1096 = vmatpush1.msra.mxu0 0.0
    %1097 = vmatprep.subr.mxu0 0.0
    %1098 = vmatpush1.msra.mxu0 0.0
    %1099 = vmatprep.subr.mxu0 0.0
    %1100 = vmatpush1.msra.mxu0 0.0
    %1101 = vmatprep.subr.mxu0 0.0
    %1102 = vmatpush1.msra.mxu0 0.0
    %1103 = vmatprep.subr.mxu0 0.0
    %1104 = vmatpush1.msra.mxu0 0.0
    %1105 = vmatprep.subr.mxu0 0.0
    %1106 = vmatpush1.msra.mxu0 0.0
    %1107 = vmatprep.subr.mxu0 0.0
    %1108 = vmatpush1.msra.mxu0 0.0
    %1109 = vmatprep.subr.mxu0 0.0
    %1110 = vmatpush1.msra.mxu0 0.0
    %1111 = vmatprep.subr.mxu0 0.0
    %1112 = vmatpush1.msra.mxu0 0.0
    %1113 = vmatprep.subr.mxu0 0.0
    %1114 = vmatpush1.msra.mxu0 0.0
    %1115 = vmatprep.subr.mxu0 0.0
    %1116 = vmatpush1.msra.mxu0 0.0
    %1117 = vmatprep.subr.mxu0 0.0
    %1118 = vmatpush1.msra.mxu0 0.0
    %1119 = vmatprep.subr.mxu0 0.0
    %1120 = vmatpush1.msra.mxu0 0.0
    %1121 = vmatprep.subr.mxu0 0.0
    %1122 = vmatpush1.msra.mxu0 0.0
    %1123 = vmatprep.subr.mxu0 0.0
    %1124 = vmatpush1.msra.mxu0 0.0
    %1125 = vmatprep.subr.mxu0 0.0
    %1126 = vmatpush1.msra.mxu0 0.0
    %1127 = vmatprep.subr.mxu0 0.0
    %1128 = vmatpush1.msra.mxu0 0.0
    %1129 = vmatprep.subr.mxu0 0.0
    %1130 = vmatpush1.msra.mxu0 0.0
    %1131 = vmatprep.mubr.f32.mxu0 0.0
    %1132 = vmatmul.mubr.f32.gmra.mrb[0].mxu0 %v1065
    %v1133 = vpop.f32.mrb[0].mxu0
    %v1134 = vadd.f32 %v1060, %v1133
    %v1135 = vpop.f32.mrb[0].mxu0
    %1136 = vdwg.mxu0
    %vm1137 = vcmask 130048
    %v1138 = vsel %vm1137, %v1134, 0.0
    %1139 = vadd.xlane.f32.xlu0 %v1138
    %v1140 = vpop.xlane.xlu0 %1139
    %v1141 = vrcp.pop 16.0
    %v1142 = vmul.f32 %v1140, %v1141
    %1144 = vrot.lane.b32.xlu0 %v1134, 112
    %v1145 = vpop.permute.xlu0 %1144
    %v1147 = vsel %vm1137, %v1145, 0.0
    %1148 = vadd.xlane.f32.xlu0 %v1147
    %v1149 = vpop.xlane.xlu0 %1148
    %v1150 = vmul.f32 %v1149, %v1141
    %v1151 = vlaneseq
    %v1152 = vand.u32 %v1151, 127
    %vm1153 = vcmp.lt.s32.totalorder %v1152, 16
    %v1154 = vsel %vm1153, %v1142, %v1150
    %v1155 = vsub.f32 %v1134, %v1154
    %vm1156 = vcmask 261120
    %1157 = vst.msk [vmem:[#allocation8] sm:$0xff] %vm1156, %v1155
    // Predicated region
    $region38: #{tpu_custom_call.1} parent=1 // pred_check
      _
    $region39: #{tpu_custom_call.1} parent=1 // pred_check_branch
      %1159 = sbr.rel (0) target = $region41
    $region40: #{tpu_custom_call.1} parent=1 // pred_region
      %s1161 = ssub.s32 128, 128
      %1162 = vsyncadd [#allocation5], %s1161
      %s1164 = sshll.u32 [#allocation8], 4
      %s1165 = int_to_ptr.vmem [resolvable:$true] %s1164
      %1167 = dma.vmem_to_hbm [thread:$0]  %s1165, 128, %s7, [#allocation5]
    $region41: #{tpu_custom_call.1} parent=1 // pred_fallthru
      _
    // Predicated region
    $region42: #{tpu_custom_call.1} parent=1 // pred_check
      _
    $region43: #{tpu_custom_call.1} parent=1 // pred_check_branch
      %1169 = sbr.rel (0) target = $region45
    $region44: #{tpu_custom_call.1} parent=1 // pred_region
      %1170 = dma.done [#allocation5], 128
    $region45: #{tpu_custom_call.1} parent=1 // pred_fallthru
      _
    %1171 = vsyncpa [#allocation4], 1
    %1172 = vsyncpa [#allocation7], 1
    %1173 = vsyncpa [#allocation5], 1

</llo_original>
